<compile_context>
chip_gen: v7x
topology: tpu7x:2x2x1
jax: 0.10.0
libtpu: 0.0.40
codegen_flags: <defaults>
</compile_context>

<pallas_src>
import functools

import jax
import jax.numpy as jnp
from jax.experimental import pallas as pl
from jax.experimental.pallas import tpu as pltpu

_OUT_COLS = 128  # lane-dense packed output slab width
# slab layout per row: [score, w0, w1, w2, rel_ix, sub_s, loc_s, rel_s, 0 ...]


# ---------------------------------------------------------------------------
# In-kernel helpers
# ---------------------------------------------------------------------------
def _row_cosine(a, b):
    """Per-row cosine via rsqrt; equals F.normalize(p=2, eps=1e-12) + dot."""
    dot = jnp.sum(a * b, axis=1, keepdims=True)
    na = jnp.sum(a * a, axis=1, keepdims=True)
    nb = jnp.sum(b * b, axis=1, keepdims=True)
    return (dot * jax.lax.rsqrt(jnp.maximum(na, 1e-24))
                * jax.lax.rsqrt(jnp.maximum(nb, 1e-24)))


# ---------------------------------------------------------------------------
# Fused kernel: packed (block-diag) MLPs + rel branch + softmax combine
# ---------------------------------------------------------------------------
def _fused_kernel(jemb, m,
                  act_ref, relv_ref, masks_ref,
                  w1_ref, b1_ref, w2_ref, b2_ref,
                  rvw1_ref, rvb1_ref, rvw2_ref, rvb2_ref,
                  out_ref):
    bn = masks_ref.shape[0]
    five = 5 * jemb

    # ---- packed layer 1: one block-diagonal MXU pass ------------------------
    # act columns: [sub_feats | sub_phrase | loc_feats | loc_phrase | rel_phrase | hidden]
    # h1 columns : [sub_v | sub_l | loc_v | loc_l | rel_l | weight_fc logits]
    h1 = jnp.dot(act_ref[...], w1_ref[...],
                 preferred_element_type=jnp.float32) + b1_ref[...]
    h = jnp.maximum(h1[:, :five], 0.0)          # branch hiddens (ReLU)
    logits = h1[:, five:five + 3]               # weight_fc output (no ReLU)

    # ---- packed layer 2: block-diag over the five jemb->jemb branches -------
    e = jnp.dot(h.astype(jnp.bfloat16), w2_ref[...],
                preferred_element_type=jnp.float32) + b2_ref[...]
    sub_v = e[:, 0 * jemb:1 * jemb]
    sub_l = e[:, 1 * jemb:2 * jemb]
    loc_v = e[:, 2 * jemb:3 * jemb]
    loc_l = e[:, 3 * jemb:4 * jemb]
    rel_l = e[:, 4 * jemb:5 * jemb]

    sub_s = _row_cosine(sub_v, sub_l)           # (bn, 1)
    loc_s = _row_cosine(loc_v, loc_l)           # (bn, 1)

    # ---- RelationMatching visual branch on flat (bn*m, d) rows --------------
    rh = jnp.maximum(
        jnp.dot(relv_ref[...], rvw1_ref[...],
                preferred_element_type=jnp.float32) + rvb1_ref[...], 0.0)
    rv = jnp.dot(rh.astype(jnp.bfloat16), rvw2_ref[...],
                 preferred_element_type=jnp.float32) + rvb2_ref[...]  # (bn*m, jemb)

    # norms + normalization stay on the flat lane-dense layout; only the final
    # cosine dot / masked max use the (bn, m, jemb) view.
    rvn = rv * jax.lax.rsqrt(
        jnp.maximum(jnp.sum(rv * rv, axis=1, keepdims=True), 1e-24))
    lel = rel_l * jax.lax.rsqrt(
        jnp.maximum(jnp.sum(rel_l * rel_l, axis=1, keepdims=True), 1e-24))
    cos = jnp.sum(rvn.reshape(bn, m, jemb) * lel[:, None, :], axis=2)  # (bn, m)
    cos = masks_ref[...] * cos      # reference semantics: mask * cos, then max
    rel_s = jnp.max(cos, axis=1, keepdims=True)                        # (bn, 1)
    colm = jax.lax.broadcasted_iota(jnp.int32, (bn, m), 1)
    rel_ix = jnp.min(jnp.where(cos == rel_s, colm, m),
                     axis=1, keepdims=True)                            # (bn, 1)

    # ---- weights = softmax(weight_fc(hidden)); scores = sum(w * [s,l,r]) ----
    ex = jnp.exp(logits - jnp.max(logits, axis=1, keepdims=True))
    w = ex / jnp.sum(ex, axis=1, keepdims=True)                        # (bn, 3)
    scores = w[:, 0:1] * sub_s + w[:, 1:2] * loc_s + w[:, 2:3] * rel_s

    # ---- iota/select build of the lane-dense output slab (no concat) --------
    col = jax.lax.broadcasted_iota(jnp.int32, (bn, _OUT_COLS), 1)
    slab = jnp.where(col == 0, scores, 0.0)
    slab = jnp.where(col == 1, w[:, 0:1], slab)
    slab = jnp.where(col == 2, w[:, 1:2], slab)
    slab = jnp.where(col == 3, w[:, 2:3], slab)
    slab = jnp.where(col == 4, rel_ix.astype(jnp.float32), slab)
    slab = jnp.where(col == 5, sub_s, slab)
    slab = jnp.where(col == 6, loc_s, slab)
    slab = jnp.where(col == 7, rel_s, slab)
    out_ref[...] = slab


# ---------------------------------------------------------------------------
# Wrapper (single pallas_call for the whole forward hot path)
# ---------------------------------------------------------------------------
def _round_up(x, k):
    return -(-x // k) * k


def _block_diag(blocks):
    rows = sum(b.shape[0] for b in blocks)
    cols = sum(b.shape[1] for b in blocks)
    out = jnp.zeros((rows, cols), jnp.float32)
    r = c = 0
    for b in blocks:
        out = out.at[r:r + b.shape[0], c:c + b.shape[1]].set(b)
        r += b.shape[0]
        c += b.shape[1]
    return out


def joint_matching_forward(inputs, params, block_n=None):
    """JointMatching.forward core (encoder outputs supplied as inputs)."""
    rel_feats = inputs['rel_feats']
    n, m, rel_dim = rel_feats.shape

    sub_v_p, sub_l_p = params['sub_matching']
    loc_v_p, loc_l_p = params['loc_matching']
    rel_v_p, rel_l_p = params['rel_matching']
    wfc = params['weight_fc']
    jemb = sub_v_p['w2'].shape[0]

    if block_n is None:
        if n <= 512:
            block_n = max(n, 8)          # single block (full-dim rule)
        else:
            # >=2 blocks so ("parallel",) can shard across v7x's two TCs;
            # cap keeps the double-buffered footprint well under VMEM limits.
            block_n = min(1024, _round_up(pl.cdiv(n, 2), 8))
    grid_n = pl.cdiv(n, block_n)
    n_pad = grid_n * block_n

    def pad_rows(x):
        if x.shape[0] == n_pad:
            return x
        return jnp.pad(x, [(0, n_pad - x.shape[0])] + [(0, 0)] * (x.ndim - 1))

    # ---- consolidated bf16 activation slab (row-level branches + hidden) ----
    act = jnp.concatenate(
        [inputs['sub_feats'], inputs['sub_phrase_emb'],
         inputs['loc_feats'], inputs['loc_phrase_emb'],
         inputs['rel_phrase_emb'], inputs['hidden']], axis=1)
    act = pad_rows(act).astype(jnp.bfloat16)
    rel_flat = pad_rows(rel_feats).reshape(n_pad * m, rel_dim).astype(jnp.bfloat16)
    masks = pad_rows(inputs['masks']).astype(jnp.float32)

    # ---- block-diagonal packed weights (bf16) + concatenated biases (f32) ---
    w1 = _block_diag([sub_v_p['w1'], sub_l_p['w1'], loc_v_p['w1'],
                      loc_l_p['w1'], rel_l_p['w1'], wfc['w']]).astype(jnp.bfloat16)
    b1 = jnp.concatenate([sub_v_p['b1'], sub_l_p['b1'], loc_v_p['b1'],
                          loc_l_p['b1'], rel_l_p['b1'], wfc['b']], axis=1)
    w2 = _block_diag([sub_v_p['w2'], sub_l_p['w2'], loc_v_p['w2'],
                      loc_l_p['w2'], rel_l_p['w2']]).astype(jnp.bfloat16)
    b2 = jnp.concatenate([sub_v_p['b2'], sub_l_p['b2'], loc_v_p['b2'],
                          loc_l_p['b2'], rel_l_p['b2']], axis=1)
    rvw1 = rel_v_p['w1'].astype(jnp.bfloat16)
    rvw2 = rel_v_p['w2'].astype(jnp.bfloat16)

    data_args = [act, rel_flat, masks]
    weight_args = [w1, b1, w2, b2, rvw1, rel_v_p['b1'], rvw2, rel_v_p['b2']]

    def row_spec(rows, cols):
        return pl.BlockSpec((rows, cols), lambda i: (i, 0))

    def full_spec(shape):
        return pl.BlockSpec(shape, lambda i: (0,) * len(shape))

    in_specs = ([row_spec(block_n, act.shape[1]),
                 row_spec(block_n * m, rel_dim),
                 row_spec(block_n, m)]
                + [full_spec(w.shape) for w in weight_args])

    kernel = functools.partial(_fused_kernel, jemb, m)

    out = pl.pallas_call(
        kernel,
        out_shape=jax.ShapeDtypeStruct((n_pad, _OUT_COLS), jnp.float32),
        grid=(grid_n,),
        in_specs=in_specs,
        out_specs=pl.BlockSpec((block_n, _OUT_COLS), lambda i: (i, 0)),
        compiler_params=pltpu.CompilerParams(
            dimension_semantics=("parallel",)),
    )(*data_args, *weight_args)

    out = out[:n]
    scores = out[:, 0]
    weights = out[:, 1:4]
    rel_ixs = out[:, 4].astype(jnp.int32)
    return scores, rel_ixs, weights


# ---------------------------------------------------------------------------
# Deterministic parameter initialization (Linear + eval-mode BN folded)
# ---------------------------------------------------------------------------
def _folded_linear_bn(key, in_dim, out_dim, eps=1e-5):
    kw, kb, kg, kbe, km, kv = jax.random.split(key, 6)
    W = 0.05 * jax.random.normal(kw, (in_dim, out_dim), jnp.float32)
    b = 0.05 * jax.random.normal(kb, (out_dim,), jnp.float32)
    gamma = 1.0 + 0.1 * jax.random.normal(kg, (out_dim,), jnp.float32)
    beta = 0.1 * jax.random.normal(kbe, (out_dim,), jnp.float32)
    mean = 0.1 * jax.random.normal(km, (out_dim,), jnp.float32)
    var = 1.0 + 0.1 * jnp.abs(jax.random.normal(kv, (out_dim,), jnp.float32))
    s = gamma / jnp.sqrt(var + eps)
    return W * s[None, :], ((b - mean) * s + beta).reshape(1, out_dim)


def _init_branch(key, in_dim, jemb_dim):
    k1, k2 = jax.random.split(key)
    w1, b1 = _folded_linear_bn(k1, in_dim, jemb_dim)
    w2, b2 = _folded_linear_bn(k2, jemb_dim, jemb_dim)
    return {'w1': w1, 'b1': b1, 'w2': w2, 'b2': b2}


def init_matching_params(key, vis_dim, lang_dim, jemb_dim):
    kv, kl = jax.random.split(key)
    return (_init_branch(kv, vis_dim, jemb_dim),
            _init_branch(kl, lang_dim, jemb_dim))


# ---------------------------------------------------------------------------
if __name__ == "__main__":
    key = jax.random.PRNGKey(0)
    n, m = 8, 5
    pan_dim = 32        # opt.pan_dim        (SubjectEncoder output dim)
    word_vec_size = 32  # opt.word_vec_size  (phrase embedding dim)
    jemb_dim = 32       # opt.jemb_dim
    hidden_dim = 32     # rnn_num_layers * num_dirs * rnn_hidden_size

    ks = jax.random.split(key, 16)

    inputs = {
        'hidden':          0.5 * jax.random.normal(ks[0], (n, hidden_dim), jnp.float32),
        'sub_feats':       jax.random.normal(ks[1], (n, pan_dim), jnp.float32),
        'sub_phrase_emb':  jax.random.normal(ks[2], (n, word_vec_size), jnp.float32),
        'loc_feats':       jax.random.normal(ks[3], (n, jemb_dim), jnp.float32),
        'loc_phrase_emb':  jax.random.normal(ks[4], (n, word_vec_size), jnp.float32),
        'rel_feats':       jax.random.normal(ks[5], (n, m, jemb_dim), jnp.float32),
        'rel_phrase_emb':  jax.random.normal(ks[6], (n, word_vec_size), jnp.float32),
        'masks': (jax.random.uniform(ks[7], (n, m)) > 0.3).astype(jnp.float32),
    }

    params = {
        'sub_matching': init_matching_params(ks[8], pan_dim, word_vec_size, jemb_dim),
        'loc_matching': init_matching_params(ks[9], jemb_dim, word_vec_size, jemb_dim),
        'rel_matching': init_matching_params(ks[10], jemb_dim, word_vec_size, jemb_dim),
        'weight_fc': {
            'w': 0.05 * jax.random.normal(ks[11], (hidden_dim, 3), jnp.float32),
            'b': 0.05 * jax.random.normal(ks[12], (1, 3), jnp.float32),
        },
    }

    scores, rel_ixs, weights = joint_matching_forward(inputs, params)
    jax.block_until_ready((scores, rel_ixs, weights))
    assert scores.shape == (n,)
    assert rel_ixs.shape == (n,)
    assert weights.shape == (n, 3)
    print("KERNEL_OK")
</pallas_src>

<mosaic_0001>
module attributes {stable_mosaic.version = 11 : i64} {
  func.func @_fused_kernel(%arg0: i32, %arg1: memref<8x192xbf16, #tpu.memory_space<vmem>>, %arg2: memref<40x32xbf16, #tpu.memory_space<vmem>>, %arg3: memref<8x5xf32, #tpu.memory_space<vmem>>, %arg4: memref<192x163xbf16, #tpu.memory_space<vmem>>, %arg5: memref<1x163xf32, #tpu.memory_space<vmem>>, %arg6: memref<160x160xbf16, #tpu.memory_space<vmem>>, %arg7: memref<1x160xf32, #tpu.memory_space<vmem>>, %arg8: memref<32x32xbf16, #tpu.memory_space<vmem>>, %arg9: memref<1x32xf32, #tpu.memory_space<vmem>>, %arg10: memref<32x32xbf16, #tpu.memory_space<vmem>>, %arg11: memref<1x32xf32, #tpu.memory_space<vmem>>, %arg12: memref<8x128xf32, #tpu.memory_space<vmem>>) attributes {dimension_semantics = [#tpu.dimension_semantics<parallel>], iteration_bounds = array<i64: 1>, scalar_prefetch = 0 : i64, scratch_operands = 0 : i64, tpu.core_type = #tpu.core_type<tc>, window_params = [{transform_indices = @transform_0, window_bounds = array<i64: 8, 192>}, {transform_indices = @transform_1, window_bounds = array<i64: 40, 32>}, {transform_indices = @transform_2, window_bounds = array<i64: 8, 5>}, {pipeline_mode = #tpu.pipeline_mode<synchronous>, transform_indices = @transform_3, window_bounds = array<i64: 192, 163>}, {pipeline_mode = #tpu.pipeline_mode<synchronous>, transform_indices = @transform_4, window_bounds = array<i64: 1, 163>}, {pipeline_mode = #tpu.pipeline_mode<synchronous>, transform_indices = @transform_5, window_bounds = array<i64: 160, 160>}, {pipeline_mode = #tpu.pipeline_mode<synchronous>, transform_indices = @transform_6, window_bounds = array<i64: 1, 160>}, {pipeline_mode = #tpu.pipeline_mode<synchronous>, transform_indices = @transform_7, window_bounds = array<i64: 32, 32>}, {pipeline_mode = #tpu.pipeline_mode<synchronous>, transform_indices = @transform_8, window_bounds = array<i64: 1, 32>}, {pipeline_mode = #tpu.pipeline_mode<synchronous>, transform_indices = @transform_9, window_bounds = array<i64: 32, 32>}, {pipeline_mode = #tpu.pipeline_mode<synchronous>, transform_indices = @transform_10, window_bounds = array<i64: 1, 32>}, {transform_indices = @transform_11, window_bounds = array<i64: 8, 128>}]} {
    %c0 = arith.constant 0 : index
    %c0_0 = arith.constant 0 : index
    %0 = vector.load %arg1[%c0, %c0_0] : memref<8x192xbf16, #tpu.memory_space<vmem>>, vector<8x192xbf16>
    %c0_1 = arith.constant 0 : index
    %c0_2 = arith.constant 0 : index
    %1 = vector.load %arg4[%c0_1, %c0_2] : memref<192x163xbf16, #tpu.memory_space<vmem>>, vector<192x163xbf16>
    %cst = arith.constant dense<0.000000e+00> : vector<8x163xf32>
    %2 = tpu.matmul %0, %1, %cst {dimension_numbers = #tpu.dot_dimension_numbers<[1], [0], [0], [1], [0, 0, 1, 1], [], []>} : vector<8x192xbf16>, vector<192x163xbf16>, vector<8x163xf32> -> vector<8x163xf32>
    %c0_3 = arith.constant 0 : index
    %c0_4 = arith.constant 0 : index
    %3 = vector.load %arg5[%c0_3, %c0_4] : memref<1x163xf32, #tpu.memory_space<vmem>>, vector<1x163xf32>
    %4 = vector.broadcast %3 : vector<1x163xf32> to vector<8x163xf32>
    %5 = arith.addf %2, %4 : vector<8x163xf32>
    %6 = vector.extract_strided_slice %5 {offsets = [0, 0], sizes = [8, 160], strides = [1, 1]} : vector<8x163xf32> to vector<8x160xf32>
    %cst_5 = arith.constant 0.000000e+00 : f32
    %7 = vector.broadcast %cst_5 : f32 to vector<8x160xf32>
    %8 = arith.maximumf %6, %7 : vector<8x160xf32>
    %9 = vector.extract_strided_slice %5 {offsets = [0, 160], sizes = [8, 3], strides = [1, 1]} : vector<8x163xf32> to vector<8x3xf32>
    %10 = arith.truncf %8 : vector<8x160xf32> to vector<8x160xbf16>
    %c0_6 = arith.constant 0 : index
    %c0_7 = arith.constant 0 : index
    %11 = vector.load %arg6[%c0_6, %c0_7] : memref<160x160xbf16, #tpu.memory_space<vmem>>, vector<160x160xbf16>
    %cst_8 = arith.constant dense<0.000000e+00> : vector<8x160xf32>
    %12 = tpu.matmul %10, %11, %cst_8 {dimension_numbers = #tpu.dot_dimension_numbers<[1], [0], [0], [1], [0, 0, 1, 1], [], []>} : vector<8x160xbf16>, vector<160x160xbf16>, vector<8x160xf32> -> vector<8x160xf32>
    %c0_9 = arith.constant 0 : index
    %c0_10 = arith.constant 0 : index
    %13 = vector.load %arg7[%c0_9, %c0_10] : memref<1x160xf32, #tpu.memory_space<vmem>>, vector<1x160xf32>
    %14 = vector.broadcast %13 : vector<1x160xf32> to vector<8x160xf32>
    %15 = arith.addf %12, %14 : vector<8x160xf32>
    %16 = vector.extract_strided_slice %15 {offsets = [0, 0], sizes = [8, 32], strides = [1, 1]} : vector<8x160xf32> to vector<8x32xf32>
    %17 = vector.extract_strided_slice %15 {offsets = [0, 32], sizes = [8, 32], strides = [1, 1]} : vector<8x160xf32> to vector<8x32xf32>
    %18 = vector.extract_strided_slice %15 {offsets = [0, 64], sizes = [8, 32], strides = [1, 1]} : vector<8x160xf32> to vector<8x32xf32>
    %19 = vector.extract_strided_slice %15 {offsets = [0, 96], sizes = [8, 32], strides = [1, 1]} : vector<8x160xf32> to vector<8x32xf32>
    %20 = vector.extract_strided_slice %15 {offsets = [0, 128], sizes = [8, 32], strides = [1, 1]} : vector<8x160xf32> to vector<8x32xf32>
    %21 = arith.mulf %16, %17 : vector<8x32xf32>
    %cst_11 = arith.constant dense<0.000000e+00> : vector<8xf32>
    %22 = vector.multi_reduction <add>, %21, %cst_11 [1] : vector<8x32xf32> to vector<8xf32>
    %23 = vector.shape_cast %22 : vector<8xf32> to vector<8x1xf32>
    %24 = arith.mulf %16, %16 : vector<8x32xf32>
    %cst_12 = arith.constant dense<0.000000e+00> : vector<8xf32>
    %25 = vector.multi_reduction <add>, %24, %cst_12 [1] : vector<8x32xf32> to vector<8xf32>
    %26 = vector.shape_cast %25 : vector<8xf32> to vector<8x1xf32>
    %27 = arith.mulf %17, %17 : vector<8x32xf32>
    %cst_13 = arith.constant dense<0.000000e+00> : vector<8xf32>
    %28 = vector.multi_reduction <add>, %27, %cst_13 [1] : vector<8x32xf32> to vector<8xf32>
    %29 = vector.shape_cast %28 : vector<8xf32> to vector<8x1xf32>
    %cst_14 = arith.constant 1.000000e-24 : f32
    %30 = vector.broadcast %cst_14 : f32 to vector<8x1xf32>
    %31 = arith.maximumf %26, %30 : vector<8x1xf32>
    %32 = math.rsqrt %31 : vector<8x1xf32>
    %33 = arith.mulf %23, %32 : vector<8x1xf32>
    %cst_15 = arith.constant 1.000000e-24 : f32
    %34 = vector.broadcast %cst_15 : f32 to vector<8x1xf32>
    %35 = arith.maximumf %29, %34 : vector<8x1xf32>
    %36 = math.rsqrt %35 : vector<8x1xf32>
    %37 = arith.mulf %33, %36 : vector<8x1xf32>
    %38 = arith.mulf %18, %19 : vector<8x32xf32>
    %cst_16 = arith.constant dense<0.000000e+00> : vector<8xf32>
    %39 = vector.multi_reduction <add>, %38, %cst_16 [1] : vector<8x32xf32> to vector<8xf32>
    %40 = vector.shape_cast %39 : vector<8xf32> to vector<8x1xf32>
    %41 = arith.mulf %18, %18 : vector<8x32xf32>
    %cst_17 = arith.constant dense<0.000000e+00> : vector<8xf32>
    %42 = vector.multi_reduction <add>, %41, %cst_17 [1] : vector<8x32xf32> to vector<8xf32>
    %43 = vector.shape_cast %42 : vector<8xf32> to vector<8x1xf32>
    %44 = arith.mulf %19, %19 : vector<8x32xf32>
    %cst_18 = arith.constant dense<0.000000e+00> : vector<8xf32>
    %45 = vector.multi_reduction <add>, %44, %cst_18 [1] : vector<8x32xf32> to vector<8xf32>
    %46 = vector.shape_cast %45 : vector<8xf32> to vector<8x1xf32>
    %cst_19 = arith.constant 1.000000e-24 : f32
    %47 = vector.broadcast %cst_19 : f32 to vector<8x1xf32>
    %48 = arith.maximumf %43, %47 : vector<8x1xf32>
    %49 = math.rsqrt %48 : vector<8x1xf32>
    %50 = arith.mulf %40, %49 : vector<8x1xf32>
    %cst_20 = arith.constant 1.000000e-24 : f32
    %51 = vector.broadcast %cst_20 : f32 to vector<8x1xf32>
    %52 = arith.maximumf %46, %51 : vector<8x1xf32>
    %53 = math.rsqrt %52 : vector<8x1xf32>
    %54 = arith.mulf %50, %53 : vector<8x1xf32>
    %c0_21 = arith.constant 0 : index
    %c0_22 = arith.constant 0 : index
    %55 = vector.load %arg2[%c0_21, %c0_22] : memref<40x32xbf16, #tpu.memory_space<vmem>>, vector<40x32xbf16>
    %c0_23 = arith.constant 0 : index
    %c0_24 = arith.constant 0 : index
    %56 = vector.load %arg8[%c0_23, %c0_24] : memref<32x32xbf16, #tpu.memory_space<vmem>>, vector<32x32xbf16>
    %cst_25 = arith.constant dense<0.000000e+00> : vector<40x32xf32>
    %57 = tpu.matmul %55, %56, %cst_25 {dimension_numbers = #tpu.dot_dimension_numbers<[1], [0], [0], [1], [0, 0, 1, 1], [], []>} : vector<40x32xbf16>, vector<32x32xbf16>, vector<40x32xf32> -> vector<40x32xf32>
    %c0_26 = arith.constant 0 : index
    %c0_27 = arith.constant 0 : index
    %58 = vector.load %arg9[%c0_26, %c0_27] : memref<1x32xf32, #tpu.memory_space<vmem>>, vector<1x32xf32>
    %59 = vector.broadcast %58 : vector<1x32xf32> to vector<40x32xf32>
    %60 = arith.addf %57, %59 : vector<40x32xf32>
    %cst_28 = arith.constant 0.000000e+00 : f32
    %61 = vector.broadcast %cst_28 : f32 to vector<40x32xf32>
    %62 = arith.maximumf %60, %61 : vector<40x32xf32>
    %63 = arith.truncf %62 : vector<40x32xf32> to vector<40x32xbf16>
    %c0_29 = arith.constant 0 : index
    %c0_30 = arith.constant 0 : index
    %64 = vector.load %arg10[%c0_29, %c0_30] : memref<32x32xbf16, #tpu.memory_space<vmem>>, vector<32x32xbf16>
    %cst_31 = arith.constant dense<0.000000e+00> : vector<40x32xf32>
    %65 = tpu.matmul %63, %64, %cst_31 {dimension_numbers = #tpu.dot_dimension_numbers<[1], [0], [0], [1], [0, 0, 1, 1], [], []>} : vector<40x32xbf16>, vector<32x32xbf16>, vector<40x32xf32> -> vector<40x32xf32>
    %c0_32 = arith.constant 0 : index
    %c0_33 = arith.constant 0 : index
    %66 = vector.load %arg11[%c0_32, %c0_33] : memref<1x32xf32, #tpu.memory_space<vmem>>, vector<1x32xf32>
    %67 = vector.broadcast %66 : vector<1x32xf32> to vector<40x32xf32>
    %68 = arith.addf %65, %67 : vector<40x32xf32>
    %69 = arith.mulf %68, %68 : vector<40x32xf32>
    %cst_34 = arith.constant dense<0.000000e+00> : vector<40xf32>
    %70 = vector.multi_reduction <add>, %69, %cst_34 [1] : vector<40x32xf32> to vector<40xf32>
    %71 = vector.shape_cast %70 : vector<40xf32> to vector<40x1xf32>
    %cst_35 = arith.constant 1.000000e-24 : f32
    %72 = vector.broadcast %cst_35 : f32 to vector<40x1xf32>
    %73 = arith.maximumf %71, %72 : vector<40x1xf32>
    %74 = math.rsqrt %73 : vector<40x1xf32>
    %75 = vector.broadcast %74 : vector<40x1xf32> to vector<40x32xf32>
    %76 = arith.mulf %68, %75 : vector<40x32xf32>
    %77 = arith.mulf %20, %20 : vector<8x32xf32>
    %cst_36 = arith.constant dense<0.000000e+00> : vector<8xf32>
    %78 = vector.multi_reduction <add>, %77, %cst_36 [1] : vector<8x32xf32> to vector<8xf32>
    %79 = vector.shape_cast %78 : vector<8xf32> to vector<8x1xf32>
    %cst_37 = arith.constant 1.000000e-24 : f32
    %80 = vector.broadcast %cst_37 : f32 to vector<8x1xf32>
    %81 = arith.maximumf %79, %80 : vector<8x1xf32>
    %82 = math.rsqrt %81 : vector<8x1xf32>
    %83 = vector.broadcast %82 : vector<8x1xf32> to vector<8x32xf32>
    %84 = arith.mulf %20, %83 : vector<8x32xf32>
    %85 = vector.shape_cast %76 : vector<40x32xf32> to vector<8x5x32xf32>
    %86 = vector.shape_cast %84 : vector<8x32xf32> to vector<8x1x32xf32>
    %87 = vector.broadcast %86 : vector<8x1x32xf32> to vector<8x5x32xf32>
    %88 = arith.mulf %85, %87 : vector<8x5x32xf32>
    %cst_38 = arith.constant dense<0.000000e+00> : vector<8x5xf32>
    %89 = vector.multi_reduction <add>, %88, %cst_38 [2] : vector<8x5x32xf32> to vector<8x5xf32>
    %c0_39 = arith.constant 0 : index
    %c0_40 = arith.constant 0 : index
    %90 = vector.load %arg3[%c0_39, %c0_40] : memref<8x5xf32, #tpu.memory_space<vmem>>, vector<8x5xf32>
    %91 = arith.mulf %90, %89 : vector<8x5xf32>
    %cst_41 = arith.constant dense<0xFF800000> : vector<8xf32>
    %92 = vector.multi_reduction <maximumf>, %91, %cst_41 [1] : vector<8x5xf32> to vector<8xf32>
    %93 = vector.shape_cast %92 : vector<8xf32> to vector<8x1xf32>
    %94 = tpu.iota {dimensions = array<i32: 1>} : vector<8x5xi32>
    %95 = vector.broadcast %93 : vector<8x1xf32> to vector<8x5xf32>
    %96 = arith.cmpf oeq, %91, %95 : vector<8x5xf32>
    %c5_i32 = arith.constant 5 : i32
    %97 = vector.broadcast %c5_i32 : i32 to vector<8x5xi32>
    %98 = arith.select %96, %94, %97 : vector<8x5xi1>, vector<8x5xi32>
    %cst_42 = arith.constant dense<2147483647> : vector<8xi32>
    %99 = vector.multi_reduction <minsi>, %98, %cst_42 [1] : vector<8x5xi32> to vector<8xi32>
    %100 = vector.shape_cast %99 : vector<8xi32> to vector<8x1xi32>
    %cst_43 = arith.constant dense<0xFF800000> : vector<8xf32>
    %101 = vector.multi_reduction <maximumf>, %9, %cst_43 [1] : vector<8x3xf32> to vector<8xf32>
    %102 = vector.shape_cast %101 : vector<8xf32> to vector<8x1xf32>
    %103 = vector.broadcast %102 : vector<8x1xf32> to vector<8x3xf32>
    %104 = arith.subf %9, %103 : vector<8x3xf32>
    %105 = math.exp %104 : vector<8x3xf32>
    %cst_44 = arith.constant dense<0.000000e+00> : vector<8xf32>
    %106 = vector.multi_reduction <add>, %105, %cst_44 [1] : vector<8x3xf32> to vector<8xf32>
    %107 = vector.shape_cast %106 : vector<8xf32> to vector<8x1xf32>
    %108 = vector.broadcast %107 : vector<8x1xf32> to vector<8x3xf32>
    %109 = arith.divf %105, %108 : vector<8x3xf32>
    %110 = vector.extract_strided_slice %109 {offsets = [0, 0], sizes = [8, 1], strides = [1, 1]} : vector<8x3xf32> to vector<8x1xf32>
    %111 = arith.mulf %110, %37 : vector<8x1xf32>
    %112 = vector.extract_strided_slice %109 {offsets = [0, 1], sizes = [8, 1], strides = [1, 1]} : vector<8x3xf32> to vector<8x1xf32>
    %113 = arith.mulf %112, %54 : vector<8x1xf32>
    %114 = arith.addf %111, %113 : vector<8x1xf32>
    %115 = vector.extract_strided_slice %109 {offsets = [0, 2], sizes = [8, 1], strides = [1, 1]} : vector<8x3xf32> to vector<8x1xf32>
    %116 = arith.mulf %115, %93 : vector<8x1xf32>
    %117 = arith.addf %114, %116 : vector<8x1xf32>
    %118 = tpu.iota {dimensions = array<i32: 1>} : vector<8x128xi32>
    %c0_i32 = arith.constant 0 : i32
    %119 = vector.broadcast %c0_i32 : i32 to vector<8x128xi32>
    %120 = arith.cmpi eq, %118, %119 : vector<8x128xi32>
    %cst_45 = arith.constant 0.000000e+00 : f32
    %121 = vector.shape_cast %117 : vector<8x1xf32> to vector<8x1xf32>
    %122 = vector.broadcast %121 : vector<8x1xf32> to vector<8x128xf32>
    %123 = vector.broadcast %cst_45 : f32 to vector<8x128xf32>
    %124 = arith.select %120, %122, %123 : vector<8x128xi1>, vector<8x128xf32>
    %c1_i32 = arith.constant 1 : i32
    %125 = vector.broadcast %c1_i32 : i32 to vector<8x128xi32>
    %126 = arith.cmpi eq, %118, %125 : vector<8x128xi32>
    %127 = vector.extract_strided_slice %109 {offsets = [0, 0], sizes = [8, 1], strides = [1, 1]} : vector<8x3xf32> to vector<8x1xf32>
    %128 = vector.shape_cast %127 : vector<8x1xf32> to vector<8x1xf32>
    %129 = vector.broadcast %128 : vector<8x1xf32> to vector<8x128xf32>
    %130 = arith.select %126, %129, %124 : vector<8x128xi1>, vector<8x128xf32>
    %c2_i32 = arith.constant 2 : i32
    %131 = vector.broadcast %c2_i32 : i32 to vector<8x128xi32>
    %132 = arith.cmpi eq, %118, %131 : vector<8x128xi32>
    %133 = vector.extract_strided_slice %109 {offsets = [0, 1], sizes = [8, 1], strides = [1, 1]} : vector<8x3xf32> to vector<8x1xf32>
    %134 = vector.shape_cast %133 : vector<8x1xf32> to vector<8x1xf32>
    %135 = vector.broadcast %134 : vector<8x1xf32> to vector<8x128xf32>
    %136 = arith.select %132, %135, %130 : vector<8x128xi1>, vector<8x128xf32>
    %c3_i32 = arith.constant 3 : i32
    %137 = vector.broadcast %c3_i32 : i32 to vector<8x128xi32>
    %138 = arith.cmpi eq, %118, %137 : vector<8x128xi32>
    %139 = vector.extract_strided_slice %109 {offsets = [0, 2], sizes = [8, 1], strides = [1, 1]} : vector<8x3xf32> to vector<8x1xf32>
    %140 = vector.shape_cast %139 : vector<8x1xf32> to vector<8x1xf32>
    %141 = vector.broadcast %140 : vector<8x1xf32> to vector<8x128xf32>
    %142 = arith.select %138, %141, %136 : vector<8x128xi1>, vector<8x128xf32>
    %c4_i32 = arith.constant 4 : i32
    %143 = vector.broadcast %c4_i32 : i32 to vector<8x128xi32>
    %144 = arith.cmpi eq, %118, %143 : vector<8x128xi32>
    %145 = arith.sitofp %100 : vector<8x1xi32> to vector<8x1xf32>
    %146 = vector.shape_cast %145 : vector<8x1xf32> to vector<8x1xf32>
    %147 = vector.broadcast %146 : vector<8x1xf32> to vector<8x128xf32>
    %148 = arith.select %144, %147, %142 : vector<8x128xi1>, vector<8x128xf32>
    %c5_i32_46 = arith.constant 5 : i32
    %149 = vector.broadcast %c5_i32_46 : i32 to vector<8x128xi32>
    %150 = arith.cmpi eq, %118, %149 : vector<8x128xi32>
    %151 = vector.shape_cast %37 : vector<8x1xf32> to vector<8x1xf32>
    %152 = vector.broadcast %151 : vector<8x1xf32> to vector<8x128xf32>
    %153 = arith.select %150, %152, %148 : vector<8x128xi1>, vector<8x128xf32>
    %c6_i32 = arith.constant 6 : i32
    %154 = vector.broadcast %c6_i32 : i32 to vector<8x128xi32>
    %155 = arith.cmpi eq, %118, %154 : vector<8x128xi32>
    %156 = vector.shape_cast %54 : vector<8x1xf32> to vector<8x1xf32>
    %157 = vector.broadcast %156 : vector<8x1xf32> to vector<8x128xf32>
    %158 = arith.select %155, %157, %153 : vector<8x128xi1>, vector<8x128xf32>
    %c7_i32 = arith.constant 7 : i32
    %159 = vector.broadcast %c7_i32 : i32 to vector<8x128xi32>
    %160 = arith.cmpi eq, %118, %159 : vector<8x128xi32>
    %161 = vector.shape_cast %93 : vector<8x1xf32> to vector<8x1xf32>
    %162 = vector.broadcast %161 : vector<8x1xf32> to vector<8x128xf32>
    %163 = arith.select %160, %162, %158 : vector<8x128xi1>, vector<8x128xf32>
    %c0_47 = arith.constant 0 : index
    %c0_48 = arith.constant 0 : index
    %164 = vector.load %arg12[%c0_47, %c0_48] : memref<8x128xf32, #tpu.memory_space<vmem>>, vector<8x128xf32>
    tpu.vector_store %arg12[%c0_47, %c0_48], %163 {strides = array<i32>} : memref<8x128xf32, #tpu.memory_space<vmem>>, vector<8x128xf32>,
    return
  }
  func.func @transform_0(%arg0: i32) -> (i32, i32) {
    %c0_i32 = arith.constant 0 : i32
    %c0_i32_0 = arith.constant 0 : i32
    return %arg0, %c0_i32 : i32, i32
  }
  func.func @transform_1(%arg0: i32) -> (i32, i32) {
    %c0_i32 = arith.constant 0 : i32
    %c0_i32_0 = arith.constant 0 : i32
    return %arg0, %c0_i32 : i32, i32
  }
  func.func @transform_2(%arg0: i32) -> (i32, i32) {
    %c0_i32 = arith.constant 0 : i32
    %c0_i32_0 = arith.constant 0 : i32
    return %arg0, %c0_i32 : i32, i32
  }
  func.func @transform_3(%arg0: i32) -> (i32, i32) {
    %c0_i32 = arith.constant 0 : i32
    %c0_i32_0 = arith.constant 0 : i32
    %c0_i32_1 = arith.constant 0 : i32
    return %c0_i32, %c0_i32_0 : i32, i32
  }
  func.func @transform_4(%arg0: i32) -> (i32, i32) {
    %c0_i32 = arith.constant 0 : i32
    %c0_i32_0 = arith.constant 0 : i32
    %c0_i32_1 = arith.constant 0 : i32
    return %c0_i32, %c0_i32_0 : i32, i32
  }
  func.func @transform_5(%arg0: i32) -> (i32, i32) {
    %c0_i32 = arith.constant 0 : i32
    %c0_i32_0 = arith.constant 0 : i32
    %c0_i32_1 = arith.constant 0 : i32
    return %c0_i32, %c0_i32_0 : i32, i32
  }
  func.func @transform_6(%arg0: i32) -> (i32, i32) {
    %c0_i32 = arith.constant 0 : i32
    %c0_i32_0 = arith.constant 0 : i32
    %c0_i32_1 = arith.constant 0 : i32
    return %c0_i32, %c0_i32_0 : i32, i32
  }
  func.func @transform_7(%arg0: i32) -> (i32, i32) {
    %c0_i32 = arith.constant 0 : i32
    %c0_i32_0 = arith.constant 0 : i32
    %c0_i32_1 = arith.constant 0 : i32
    return %c0_i32, %c0_i32_0 : i32, i32
  }
  func.func @transform_8(%arg0: i32) -> (i32, i32) {
    %c0_i32 = arith.constant 0 : i32
    %c0_i32_0 = arith.constant 0 : i32
    %c0_i32_1 = arith.constant 0 : i32
    return %c0_i32, %c0_i32_0 : i32, i32
  }
  func.func @transform_9(%arg0: i32) -> (i32, i32) {
    %c0_i32 = arith.constant 0 : i32
    %c0_i32_0 = arith.constant 0 : i32
    %c0_i32_1 = arith.constant 0 : i32
    return %c0_i32, %c0_i32_0 : i32, i32
  }
  func.func @transform_10(%arg0: i32) -> (i32, i32) {
    %c0_i32 = arith.constant 0 : i32
    %c0_i32_0 = arith.constant 0 : i32
    %c0_i32_1 = arith.constant 0 : i32
    return %c0_i32, %c0_i32_0 : i32, i32
  }
  func.func @transform_11(%arg0: i32) -> (i32, i32) {
    %c0_i32 = arith.constant 0 : i32
    %c0_i32_0 = arith.constant 0 : i32
    return %arg0, %c0_i32 : i32, i32
  }
}

</mosaic_0001>

<llo_original>
// kernel: tpu_custom_call.1
$region0: #{tpu_custom_call.1}
  #allocation0 [shape = 'u32[]', space=smem, size = 0x4, offset = 0x4, fixed_abs, tag = 'smem constant byte address 0x4 - core index']
  #allocation1 [shape = 'u32[144,128]{1,0:T(1,128)}', space=vmem, size = 0x12000, scoped, tag = 'internal scratch']
  %s0 = inlined_call_operand.vmem [shape: bf16[8,192], index: 0, kind: input, shape index: {}]
  %s1 = inlined_call_operand.vmem [shape: bf16[40,32], index: 1, kind: input, shape index: {}]
  %s2 = inlined_call_operand.vmem [shape: f32[8,5], index: 2, kind: input, shape index: {}]
  %s3 = inlined_call_operand.vmem [shape: bf16[192,163], index: 3, kind: input, shape index: {}]
  %s4 = inlined_call_operand.vmem [shape: f32[1,163], index: 4, kind: input, shape index: {}]
  %s5 = inlined_call_operand.vmem [shape: bf16[160,160], index: 5, kind: input, shape index: {}]
  %s6 = inlined_call_operand.vmem [shape: f32[1,160], index: 6, kind: input, shape index: {}]
  %s7 = inlined_call_operand.vmem [shape: bf16[32,32], index: 7, kind: input, shape index: {}]
  %s8 = inlined_call_operand.vmem [shape: f32[1,32], index: 8, kind: input, shape index: {}]
  %s9 = inlined_call_operand.vmem [shape: bf16[32,32], index: 9, kind: input, shape index: {}]
  %s10 = inlined_call_operand.vmem [shape: f32[1,32], index: 10, kind: input, shape index: {}]
  %s11 = inlined_call_operand.hbm [shape: f32[8,128], index: 11, kind: output, shape index: {}]
  %s12 = sld [smem:[#allocation0]]
  $region54: #{tpu_custom_call.1} parent=0
    _
  %s14 = ssub.s32 1, %s12
  %s15 = scalar_select 0, %s14, %s12
  $region1: #{tpu_custom_call.1} parent=0
    #allocation2 [shape = 'u8[4096]{0}', space=vmem, size = 0x1000, scoped, tag = 'output window, operand 0, single buffered']
    #allocation3 [shape = 's32[1]{0}', space=sflag, size = 0x4, scoped, tag = 'scoped memory for tpu_custom_call.1']
    %16 = vsyncpa [#allocation3], 0
    // Predicated region
    $region2: #{tpu_custom_call.1} parent=1 // pred_check
      _
    $region3: #{tpu_custom_call.1} parent=1 // pred_check_branch
      %18 = sbr.rel (0) target = $region5
    $region4: #{tpu_custom_call.1} parent=1 // pred_region
      _
    $region5: #{tpu_custom_call.1} parent=1 // pred_fallthru
      _
    // Predicated region
    $region6: #{tpu_custom_call.1} parent=1 // pred_check
      _
    $region7: #{tpu_custom_call.1} parent=1 // pred_check_branch
      %20 = sbr.rel (0) target = $region9
    $region8: #{tpu_custom_call.1} parent=1 // pred_region
      _
    $region9: #{tpu_custom_call.1} parent=1 // pred_fallthru
      _
    // Predicated region
    $region10: #{tpu_custom_call.1} parent=1 // pred_check
      _
    $region11: #{tpu_custom_call.1} parent=1 // pred_check_branch
      %22 = sbr.rel (0) target = $region13
    $region12: #{tpu_custom_call.1} parent=1 // pred_region
      _
    $region13: #{tpu_custom_call.1} parent=1 // pred_fallthru
      _
    // Predicated region
    $region14: #{tpu_custom_call.1} parent=1 // pred_check
      _
    $region15: #{tpu_custom_call.1} parent=1 // pred_check_branch
      %24 = sbr.rel (0) target = $region17
    $region16: #{tpu_custom_call.1} parent=1 // pred_region
      _
    $region17: #{tpu_custom_call.1} parent=1 // pred_fallthru
      _
    // Predicated region
    $region18: #{tpu_custom_call.1} parent=1 // pred_check
      _
    $region19: #{tpu_custom_call.1} parent=1 // pred_check_branch
      %26 = sbr.rel (0) target = $region21
    $region20: #{tpu_custom_call.1} parent=1 // pred_region
      _
    $region21: #{tpu_custom_call.1} parent=1 // pred_fallthru
      _
    // Predicated region
    $region22: #{tpu_custom_call.1} parent=1 // pred_check
      _
    $region23: #{tpu_custom_call.1} parent=1 // pred_check_branch
      %28 = sbr.rel (0) target = $region25
    $region24: #{tpu_custom_call.1} parent=1 // pred_region
      _
    $region25: #{tpu_custom_call.1} parent=1 // pred_fallthru
      _
    // Predicated region
    $region26: #{tpu_custom_call.1} parent=1 // pred_check
      _
    $region27: #{tpu_custom_call.1} parent=1 // pred_check_branch
      %30 = sbr.rel (0) target = $region29
    $region28: #{tpu_custom_call.1} parent=1 // pred_region
      _
    $region29: #{tpu_custom_call.1} parent=1 // pred_fallthru
      _
    // Predicated region
    $region30: #{tpu_custom_call.1} parent=1 // pred_check
      _
    $region31: #{tpu_custom_call.1} parent=1 // pred_check_branch
      %32 = sbr.rel (0) target = $region33
    $region32: #{tpu_custom_call.1} parent=1 // pred_region
      _
    $region33: #{tpu_custom_call.1} parent=1 // pred_fallthru
      _
    // Predicated region
    $region34: #{tpu_custom_call.1} parent=1 // pred_check
      _
    $region35: #{tpu_custom_call.1} parent=1 // pred_check_branch
      %34 = sbr.rel (0) target = $region37
    $region36: #{tpu_custom_call.1} parent=1 // pred_region
      _
    $region37: #{tpu_custom_call.1} parent=1 // pred_fallthru
      _
    // Predicated region
    $region38: #{tpu_custom_call.1} parent=1 // pred_check
      _
    $region39: #{tpu_custom_call.1} parent=1 // pred_check_branch
      %36 = sbr.rel (0) target = $region41
    $region40: #{tpu_custom_call.1} parent=1 // pred_region
      _
    $region41: #{tpu_custom_call.1} parent=1 // pred_fallthru
      _
    // Predicated region
    $region42: #{tpu_custom_call.1} parent=1 // pred_check
      _
    $region43: #{tpu_custom_call.1} parent=1 // pred_check_branch
      %38 = sbr.rel (0) target = $region45
    $region44: #{tpu_custom_call.1} parent=1 // pred_region
      _
    $region45: #{tpu_custom_call.1} parent=1 // pred_fallthru
      _
    %v40 = vld [vmem:[%s0] sm:$0xff]
    %v41 = vld [vmem:[%s3] sm:$0xff]
    %v42 = vld [vmem:[%s3 + $0x8] sm:$0xff]
    %v43 = vld [vmem:[%s3 + $0x10] sm:$0xff]
    %v44 = vld [vmem:[%s3 + $0x18] sm:$0xff]
    %v45 = vld [vmem:[%s3 + $0x20] sm:$0xff]
    %v46 = vld [vmem:[%s3 + $0x28] sm:$0xff]
    %v47 = vld [vmem:[%s3 + $0x30] sm:$0xff]
    %v48 = vld [vmem:[%s3 + $0x38] sm:$0xff]
    %v49 = vld [vmem:[%s3 + $0x40] sm:$0xff]
    %v50 = vld [vmem:[%s3 + $0x48] sm:$0xff]
    %v51 = vld [vmem:[%s3 + $0x50] sm:$0xff]
    %v52 = vld [vmem:[%s3 + $0x58] sm:$0xff]
    %v53 = vld [vmem:[%s3 + $0x60] sm:$0xff]
    %v54 = vld [vmem:[%s3 + $0x68] sm:$0xff]
    %v55 = vld [vmem:[%s3 + $0x70] sm:$0xff]
    %v56 = vld [vmem:[%s3 + $0x78] sm:$0xff]
    %v57 = vld [vmem:[%s3 + $0x80] sm:$0xff]
    %v58 = vld [vmem:[%s3 + $0x88] sm:$0xff]
    %v59 = vld [vmem:[%s3 + $0x90] sm:$0xff]
    %v60 = vld [vmem:[%s3 + $0x98] sm:$0xff]
    %v61 = vld [vmem:[%s3 + $0xa0] sm:$0xff]
    %v62 = vld [vmem:[%s3 + $0xa8] sm:$0xff]
    %v63 = vld [vmem:[%s3 + $0xb0] sm:$0xff]
    %v64 = vld [vmem:[%s3 + $0xb8] sm:$0xff]
    %v65 = vld [vmem:[%s4] sm:$0x3]
    %v67 = vlaneseq
    %v68 = vshrl.u32 %v67, 7
    %v69 = vsub.s32 0, %v68
    %v70 = vrot.slane %v65, %v69
    %v71 = vlaneseq
    %v72 = vshrl.u32 %v71, 7
    %v73 = vsub.s32 1, %v72
    %v74 = vrot.slane %v65, %v73
    %v78 = vunpack.c.l.b16 %v40
    %v79 = vunpack.c.h.b16 %v40
    %v80 = vpack.c.b16 %v78, %v78
    %v81 = vpack.c.b16 %v79, %v79
    %v107 = vunpack.c.l.b16 %v41
    %v108 = vunpack.c.h.b16 %v41
    %v109 = vunpack.c.l.b16 %v42
    %v110 = vunpack.c.h.b16 %v42
    %v111 = vunpack.c.l.b16 %v43
    %v112 = vunpack.c.h.b16 %v43
    %v113 = vunpack.c.l.b16 %v44
    %v114 = vunpack.c.h.b16 %v44
    %v115 = vunpack.c.l.b16 %v45
    %v116 = vunpack.c.h.b16 %v45
    %v117 = vunpack.c.l.b16 %v46
    %v118 = vunpack.c.h.b16 %v46
    %v119 = vunpack.c.l.b16 %v47
    %v120 = vunpack.c.h.b16 %v47
    %v121 = vunpack.c.l.b16 %v48
    %v122 = vunpack.c.h.b16 %v48
    %v123 = vunpack.c.l.b16 %v49
    %v124 = vunpack.c.h.b16 %v49
    %v125 = vunpack.c.l.b16 %v50
    %v126 = vunpack.c.h.b16 %v50
    %v127 = vunpack.c.l.b16 %v51
    %v128 = vunpack.c.h.b16 %v51
    %v129 = vunpack.c.l.b16 %v52
    %v130 = vunpack.c.h.b16 %v52
    %v131 = vunpack.c.l.b16 %v53
    %v132 = vunpack.c.h.b16 %v53
    %v133 = vunpack.c.l.b16 %v54
    %v134 = vunpack.c.h.b16 %v54
    %v135 = vunpack.c.l.b16 %v55
    %v136 = vunpack.c.h.b16 %v55
    %v137 = vunpack.c.l.b16 %v56
    %v138 = vunpack.c.h.b16 %v56
    %v139 = vunpack.c.l.b16 %v57
    %v140 = vunpack.c.h.b16 %v57
    %v141 = vunpack.c.l.b16 %v58
    %v142 = vunpack.c.h.b16 %v58
    %v143 = vunpack.c.l.b16 %v59
    %v144 = vunpack.c.h.b16 %v59
    %v145 = vunpack.c.l.b16 %v60
    %v146 = vunpack.c.h.b16 %v60
    %v147 = vunpack.c.l.b16 %v61
    %v148 = vunpack.c.h.b16 %v61
    %v149 = vunpack.c.l.b16 %v62
    %v150 = vunpack.c.h.b16 %v62
    %v151 = vunpack.c.l.b16 %v63
    %v152 = vunpack.c.h.b16 %v63
    %v153 = vunpack.c.l.b16 %v64
    %v154 = vunpack.c.h.b16 %v64
    %v155 = vpack.c.b16 %v109, %v107
    %v156 = vpack.c.b16 %v110, %v108
    %v157 = vpack.c.b16 %v113, %v111
    %v158 = vpack.c.b16 %v114, %v112
    %v159 = vpack.c.b16 %v117, %v115
    %v160 = vpack.c.b16 %v118, %v116
    %v161 = vpack.c.b16 %v121, %v119
    %v162 = vpack.c.b16 %v122, %v120
    %v163 = vpack.c.b16 %v125, %v123
    %v164 = vpack.c.b16 %v126, %v124
    %v165 = vpack.c.b16 %v129, %v127
    %v166 = vpack.c.b16 %v130, %v128
    %v167 = vpack.c.b16 %v133, %v131
    %v168 = vpack.c.b16 %v134, %v132
    %v169 = vpack.c.b16 %v137, %v135
    %v170 = vpack.c.b16 %v138, %v136
    %v171 = vpack.c.b16 %v141, %v139
    %v172 = vpack.c.b16 %v142, %v140
    %v173 = vpack.c.b16 %v145, %v143
    %v174 = vpack.c.b16 %v146, %v144
    %v175 = vpack.c.b16 %v149, %v147
    %v176 = vpack.c.b16 %v150, %v148
    %v177 = vpack.c.b16 %v153, %v151
    %v178 = vpack.c.b16 %v154, %v152
    %vm203 = vcmask 523264
    %v205 = vsel %vm203, %v81, 0
    %207 = vmatprep.subr.bf16.mxu0 %v156
    %208 = vmatpush1.bf16.msra.mxu0 %v155
    %209 = vmatprep.subr.bf16.mxu0 %v158
    %210 = vmatpush1.bf16.msra.mxu0 %v157
    %211 = vmatprep.subr.bf16.mxu0 %v160
    %212 = vmatpush1.bf16.msra.mxu0 %v159
    %213 = vmatprep.subr.bf16.mxu0 %v162
    %214 = vmatpush1.bf16.msra.mxu0 %v161
    %215 = vmatprep.subr.bf16.mxu0 %v164
    %216 = vmatpush1.bf16.msra.mxu0 %v163
    %217 = vmatprep.subr.bf16.mxu0 %v166
    %218 = vmatpush1.bf16.msra.mxu0 %v165
    %219 = vmatprep.subr.bf16.mxu0 %v168
    %220 = vmatpush1.bf16.msra.mxu0 %v167
    %221 = vmatprep.subr.bf16.mxu0 %v170
    %222 = vmatpush1.bf16.msra.mxu0 %v169
    %223 = vmatprep.subr.bf16.mxu0 %v172
    %224 = vmatpush1.bf16.msra.mxu0 %v171
    %225 = vmatprep.subr.bf16.mxu0 %v174
    %226 = vmatpush1.bf16.msra.mxu0 %v173
    %227 = vmatprep.subr.bf16.mxu0 %v176
    %228 = vmatpush1.bf16.msra.mxu0 %v175
    %229 = vmatprep.subr.bf16.mxu0 %v178
    %230 = vmatpush1.bf16.msra.mxu0 %v177
    %231 = vmatprep.subr.bf16.mxu0 0
    %232 = vmatpush1.bf16.msra.mxu0 0
    %233 = vmatprep.subr.bf16.mxu0 0
    %234 = vmatpush1.bf16.msra.mxu0 0
    %235 = vmatprep.subr.bf16.mxu0 0
    %236 = vmatpush1.bf16.msra.mxu0 0
    %237 = vmatprep.subr.bf16.mxu0 0
    %238 = vmatpush1.bf16.msra.mxu0 0
    %239 = vmatprep.mubr.bf16.mxu0 %v205
    %240 = vmatmul.mubr.bf16.gmra.mrb[0].mxu0 %v80
    %v241 = vpop.f32.mrb[0].mxu0
    %v242 = vadd.f32 %v70, %v241
    %v243 = vpop.f32.mrb[0].mxu0
    %v244 = vadd.f32 %v74, %v243
    %v245 = vpop.f32.mrb[0].mxu0
    %v246 = vpop.f32.mrb[0].mxu0
    %247 = vdwg.mxu0
    %v248 = vmax.f32 %v242, 0.0
    %v249 = vmax.f32 %v244, 0.0
    %v250 = vpack.c.bf16 %v248, %v248
    %v251 = vpack.c.bf16 %v249, %v249
    %v252 = vld [vmem:[%s5] sm:$0xff]
    %v253 = vld [vmem:[%s5 + $0x8] sm:$0xff]
    %v254 = vld [vmem:[%s5 + $0x10] sm:$0xff]
    %v255 = vld [vmem:[%s5 + $0x18] sm:$0xff]
    %v256 = vld [vmem:[%s5 + $0x20] sm:$0xff]
    %v257 = vld [vmem:[%s5 + $0x28] sm:$0xff]
    %v258 = vld [vmem:[%s5 + $0x30] sm:$0xff]
    %v259 = vld [vmem:[%s5 + $0x38] sm:$0xff]
    %v260 = vld [vmem:[%s5 + $0x40] sm:$0xff]
    %v261 = vld [vmem:[%s5 + $0x48] sm:$0xff]
    %v262 = vld [vmem:[%s5 + $0x50] sm:$0xff]
    %v263 = vld [vmem:[%s5 + $0x58] sm:$0xff]
    %v264 = vld [vmem:[%s5 + $0x60] sm:$0xff]
    %v265 = vld [vmem:[%s5 + $0x68] sm:$0xff]
    %v266 = vld [vmem:[%s5 + $0x70] sm:$0xff]
    %v267 = vld [vmem:[%s5 + $0x78] sm:$0xff]
    %v268 = vld [vmem:[%s5 + $0x80] sm:$0xff]
    %v269 = vld [vmem:[%s5 + $0x88] sm:$0xff]
    %v270 = vld [vmem:[%s5 + $0x90] sm:$0xff]
    %v271 = vld [vmem:[%s5 + $0x98] sm:$0xff]
    %v272 = vld [vmem:[%s6] sm:$0x3]
    %v274 = vlaneseq
    %v275 = vshrl.u32 %v274, 7
    %v276 = vsub.s32 0, %v275
    %v277 = vrot.slane %v272, %v276
    %v278 = vlaneseq
    %v279 = vshrl.u32 %v278, 7
    %v280 = vsub.s32 1, %v279
    %v281 = vrot.slane %v272, %v280
    %v304 = vunpack.c.l.b16 %v252
    %v305 = vunpack.c.h.b16 %v252
    %v306 = vunpack.c.l.b16 %v253
    %v307 = vunpack.c.h.b16 %v253
    %v308 = vunpack.c.l.b16 %v254
    %v309 = vunpack.c.h.b16 %v254
    %v310 = vunpack.c.l.b16 %v255
    %v311 = vunpack.c.h.b16 %v255
    %v312 = vunpack.c.l.b16 %v256
    %v313 = vunpack.c.h.b16 %v256
    %v314 = vunpack.c.l.b16 %v257
    %v315 = vunpack.c.h.b16 %v257
    %v316 = vunpack.c.l.b16 %v258
    %v317 = vunpack.c.h.b16 %v258
    %v318 = vunpack.c.l.b16 %v259
    %v319 = vunpack.c.h.b16 %v259
    %v320 = vunpack.c.l.b16 %v260
    %v321 = vunpack.c.h.b16 %v260
    %v322 = vunpack.c.l.b16 %v261
    %v323 = vunpack.c.h.b16 %v261
    %v324 = vunpack.c.l.b16 %v262
    %v325 = vunpack.c.h.b16 %v262
    %v326 = vunpack.c.l.b16 %v263
    %v327 = vunpack.c.h.b16 %v263
    %v328 = vunpack.c.l.b16 %v264
    %v329 = vunpack.c.h.b16 %v264
    %v330 = vunpack.c.l.b16 %v265
    %v331 = vunpack.c.h.b16 %v265
    %v332 = vunpack.c.l.b16 %v266
    %v333 = vunpack.c.h.b16 %v266
    %v334 = vunpack.c.l.b16 %v267
    %v335 = vunpack.c.h.b16 %v267
    %v336 = vunpack.c.l.b16 %v268
    %v337 = vunpack.c.h.b16 %v268
    %v338 = vunpack.c.l.b16 %v269
    %v339 = vunpack.c.h.b16 %v269
    %v340 = vunpack.c.l.b16 %v270
    %v341 = vunpack.c.h.b16 %v270
    %v342 = vunpack.c.l.b16 %v271
    %v343 = vunpack.c.h.b16 %v271
    %v344 = vpack.c.b16 %v306, %v304
    %v345 = vpack.c.b16 %v307, %v305
    %v346 = vpack.c.b16 %v310, %v308
    %v347 = vpack.c.b16 %v311, %v309
    %v348 = vpack.c.b16 %v314, %v312
    %v349 = vpack.c.b16 %v315, %v313
    %v350 = vpack.c.b16 %v318, %v316
    %v351 = vpack.c.b16 %v319, %v317
    %v352 = vpack.c.b16 %v322, %v320
    %v353 = vpack.c.b16 %v323, %v321
    %v354 = vpack.c.b16 %v326, %v324
    %v355 = vpack.c.b16 %v327, %v325
    %v356 = vpack.c.b16 %v330, %v328
    %v357 = vpack.c.b16 %v331, %v329
    %v358 = vpack.c.b16 %v334, %v332
    %v359 = vpack.c.b16 %v335, %v333
    %v360 = vpack.c.b16 %v338, %v336
    %v361 = vpack.c.b16 %v339, %v337
    %v362 = vpack.c.b16 %v342, %v340
    %v363 = vpack.c.b16 %v343, %v341
    %vm384 = vcmask 261120
    %v386 = vsel %vm384, %v251, 0
    %388 = vmatprep.subr.bf16.mxu0 %v345
    %389 = vmatpush1.bf16.msra.mxu0 %v344
    %390 = vmatprep.subr.bf16.mxu0 %v347
    %391 = vmatpush1.bf16.msra.mxu0 %v346
    %392 = vmatprep.subr.bf16.mxu0 %v349
    %393 = vmatpush1.bf16.msra.mxu0 %v348
    %394 = vmatprep.subr.bf16.mxu0 %v351
    %395 = vmatpush1.bf16.msra.mxu0 %v350
    %396 = vmatprep.subr.bf16.mxu0 %v353
    %397 = vmatpush1.bf16.msra.mxu0 %v352
    %398 = vmatprep.subr.bf16.mxu0 %v355
    %399 = vmatpush1.bf16.msra.mxu0 %v354
    %400 = vmatprep.subr.bf16.mxu0 %v357
    %401 = vmatpush1.bf16.msra.mxu0 %v356
    %402 = vmatprep.subr.bf16.mxu0 %v359
    %403 = vmatpush1.bf16.msra.mxu0 %v358
    %404 = vmatprep.subr.bf16.mxu0 %v361
    %405 = vmatpush1.bf16.msra.mxu0 %v360
    %406 = vmatprep.subr.bf16.mxu0 %v363
    %407 = vmatpush1.bf16.msra.mxu0 %v362
    %408 = vmatprep.subr.bf16.mxu0 0
    %409 = vmatpush1.bf16.msra.mxu0 0
    %410 = vmatprep.subr.bf16.mxu0 0
    %411 = vmatpush1.bf16.msra.mxu0 0
    %412 = vmatprep.subr.bf16.mxu0 0
    %413 = vmatpush1.bf16.msra.mxu0 0
    %414 = vmatprep.subr.bf16.mxu0 0
    %415 = vmatpush1.bf16.msra.mxu0 0
    %416 = vmatprep.subr.bf16.mxu0 0
    %417 = vmatpush1.bf16.msra.mxu0 0
    %418 = vmatprep.subr.bf16.mxu0 0
    %419 = vmatpush1.bf16.msra.mxu0 0
    %420 = vmatprep.mubr.bf16.mxu0 %v386
    %421 = vmatmul.mubr.bf16.gmra.mrb[0].mxu0 %v250
    %v422 = vpop.f32.mrb[0].mxu0
    %v423 = vadd.f32 %v277, %v422
    %v424 = vpop.f32.mrb[0].mxu0
    %v425 = vadd.f32 %v281, %v424
    %v426 = vpop.f32.mrb[0].mxu0
    %v427 = vpop.f32.mrb[0].mxu0
    %428 = vdwg.mxu0
    %430 = vrot.lane.b32.xlu0 %v423, 96
    %v431 = vpop.permute.xlu0 %430
    %v433 = vmul.f32 %v423, %v431
    %v434 = vsel %vm384, %v433, 0.0
    %435 = vadd.xlane.f32.xlu0 %v434
    %v436 = vpop.xlane.xlu0 %435
    %v437 = vmul.f32 %v423, %v423
    %v438 = vsel %vm384, %v437, 0.0
    %439 = vadd.xlane.f32.xlu0 %v438
    %v440 = vpop.xlane.xlu0 %439
    %442 = vrot.lane.b32.xlu0 %v437, 96
    %v443 = vpop.permute.xlu0 %442
    %v445 = vsel %vm384, %v443, 0.0
    %446 = vadd.xlane.f32.xlu0 %v445
    %v447 = vpop.xlane.xlu0 %446
    %v448 = vmax.f32 %v440, 1e-24
    %v449 = vrsqrt.pop %v448
    %v450 = vmul.f32 %v436, %v449
    %v451 = vmax.f32 %v447, 1e-24
    %v452 = vrsqrt.pop %v451
    %v453 = vmul.f32 %v450, %v452
    %455 = vrot.lane.b32.xlu0 %v433, 64
    %v456 = vpop.permute.xlu0 %455
    %v458 = vsel %vm384, %v456, 0.0
    %459 = vadd.xlane.f32.xlu0 %v458
    %v460 = vpop.xlane.xlu0 %459
    %461 = vrot.lane.b32.xlu0 %v437, 64
    %v462 = vpop.permute.xlu0 %461
    %v464 = vsel %vm384, %v462, 0.0
    %465 = vadd.xlane.f32.xlu0 %v464
    %v466 = vpop.xlane.xlu0 %465
    %467 = vrot.lane.b32.xlu0 %v437, 32
    %v468 = vpop.permute.xlu0 %467
    %v470 = vsel %vm384, %v468, 0.0
    %471 = vadd.xlane.f32.xlu0 %v470
    %v472 = vpop.xlane.xlu0 %471
    %v473 = vmax.f32 %v466, 1e-24
    %v474 = vrsqrt.pop %v473
    %v475 = vmul.f32 %v460, %v474
    %v476 = vmax.f32 %v472, 1e-24
    %v477 = vrsqrt.pop %v476
    %v478 = vmul.f32 %v475, %v477
    %v479 = vld [vmem:[%s1] sm:$0xf]
    %v480 = vld [vmem:[%s1 + $0x4] sm:$0xf]
    %v481 = vld [vmem:[%s1 + $0x8] sm:$0xf]
    %v482 = vld [vmem:[%s1 + $0xc] sm:$0xf]
    %v483 = vld [vmem:[%s1 + $0x10] sm:$0xf]
    %v484 = vld [vmem:[%s7] sm:$0xf]
    %v485 = vld [vmem:[%s7 + $0x4] sm:$0xf]
    %v486 = vld [vmem:[%s7 + $0x8] sm:$0xf]
    %v487 = vld [vmem:[%s7 + $0xc] sm:$0xf]
    %v488 = vld [vmem:[%s8] sm:$0x1]
    %v490 = vlaneseq
    %v491 = vshrl.u32 %v490, 7
    %v492 = vsub.s32 0, %v491
    %v493 = vrot.slane %v488, %v492
    %v500 = vunpack.c.l.b16 %v479
    %v501 = vunpack.c.l.b16 %v480
    %v502 = vunpack.c.l.b16 %v481
    %v503 = vunpack.c.l.b16 %v482
    %v504 = vunpack.c.l.b16 %v483
    %v505 = vpack.c.b16 %v501, %v500
    %v506 = vpack.c.b16 %v503, %v502
    %v507 = vpack.c.b16 %v504, %v504
    %v512 = vunpack.c.l.b16 %v484
    %v513 = vunpack.c.l.b16 %v485
    %v514 = vunpack.c.l.b16 %v486
    %v515 = vunpack.c.l.b16 %v487
    %v516 = vpack.c.b16 %v513, %v512
    %v517 = vpack.c.b16 %v515, %v514
    %v521 = vsel %vm384, %v505, 0
    %v524 = vsel %vm384, %v506, 0
    %v527 = vsel %vm384, %v507, 0
    %529 = vmatprep.subr.bf16.mxu0 0
    %530 = vmatpush1.bf16.msra.mxu0 %v516
    %531 = vmatprep.subr.bf16.mxu0 0
    %532 = vmatpush1.bf16.msra.mxu0 %v517
    %533 = vmatprep.subr.bf16.mxu0 0
    %534 = vmatpush1.bf16.msra.mxu0 0
    %535 = vmatprep.subr.bf16.mxu0 0
    %536 = vmatpush1.bf16.msra.mxu0 0
    %537 = vmatprep.subr.bf16.mxu0 0
    %538 = vmatpush1.bf16.msra.mxu0 0
    %539 = vmatprep.subr.bf16.mxu0 0
    %540 = vmatpush1.bf16.msra.mxu0 0
    %541 = vmatprep.subr.bf16.mxu0 0
    %542 = vmatpush1.bf16.msra.mxu0 0
    %543 = vmatprep.subr.bf16.mxu0 0
    %544 = vmatpush1.bf16.msra.mxu0 0
    %545 = vmatprep.subr.bf16.mxu0 0
    %546 = vmatpush1.bf16.msra.mxu0 0
    %547 = vmatprep.subr.bf16.mxu0 0
    %548 = vmatpush1.bf16.msra.mxu0 0
    %549 = vmatprep.subr.bf16.mxu0 0
    %550 = vmatpush1.bf16.msra.mxu0 0
    %551 = vmatprep.subr.bf16.mxu0 0
    %552 = vmatpush1.bf16.msra.mxu0 0
    %553 = vmatprep.subr.bf16.mxu0 0
    %554 = vmatpush1.bf16.msra.mxu0 0
    %555 = vmatprep.subr.bf16.mxu0 0
    %556 = vmatpush1.bf16.msra.mxu0 0
    %557 = vmatprep.subr.bf16.mxu0 0
    %558 = vmatpush1.bf16.msra.mxu0 0
    %559 = vmatprep.subr.bf16.mxu0 0
    %560 = vmatpush1.bf16.msra.mxu0 0
    %561 = vmatprep.mubr.bf16.mxu0 0
    %562 = vmatmul.mubr.bf16.gmra.mrb[0].mxu0 %v521
    %v563 = vpop.f32.mrb[0].mxu0
    %v564 = vadd.f32 %v493, %v563
    %v565 = vpop.f32.mrb[0].mxu0
    %v566 = vpop.f32.mrb[0].mxu0
    %v567 = vadd.f32 %v493, %v566
    %v568 = vpop.f32.mrb[0].mxu0
    %569 = vmatprep.mubr.bf16.mxu0 0
    %570 = vmatmul.mubr.bf16.gmra.mrb[0].mxu0 %v524
    %v571 = vpop.f32.mrb[0].mxu0
    %v572 = vadd.f32 %v493, %v571
    %v573 = vpop.f32.mrb[0].mxu0
    %v574 = vpop.f32.mrb[0].mxu0
    %v575 = vadd.f32 %v493, %v574
    %v576 = vpop.f32.mrb[0].mxu0
    %577 = vmatprep.mubr.bf16.mxu0 0
    %578 = vmatmul.mubr.bf16.gmra.mrb[0].mxu0 %v527
    %v579 = vpop.f32.mrb[0].mxu0
    %v580 = vadd.f32 %v493, %v579
    %v581 = vpop.f32.mrb[0].mxu0
    %v582 = vpop.f32.mrb[0].mxu0
    %v583 = vpop.f32.mrb[0].mxu0
    %584 = vdwg.mxu0
    %v585 = vmax.f32 %v564, 0.0
    %v586 = vmax.f32 %v567, 0.0
    %v587 = vmax.f32 %v572, 0.0
    %v588 = vmax.f32 %v575, 0.0
    %v589 = vmax.f32 %v580, 0.0
    %v590 = vpack.c.bf16 %v586, %v585
    %v591 = vpack.c.bf16 %v588, %v587
    %v592 = vpack.c.bf16 %v589, %v589
    %v593 = vld [vmem:[%s9] sm:$0xf]
    %v594 = vld [vmem:[%s9 + $0x4] sm:$0xf]
    %v595 = vld [vmem:[%s9 + $0x8] sm:$0xf]
    %v596 = vld [vmem:[%s9 + $0xc] sm:$0xf]
    %v597 = vld [vmem:[%s10] sm:$0x1]
    %v599 = vlaneseq
    %v600 = vshrl.u32 %v599, 7
    %v601 = vsub.s32 0, %v600
    %v602 = vrot.slane %v597, %v601
    %v608 = vunpack.c.l.b16 %v593
    %v609 = vunpack.c.l.b16 %v594
    %v610 = vunpack.c.l.b16 %v595
    %v611 = vunpack.c.l.b16 %v596
    %v612 = vpack.c.b16 %v609, %v608
    %v613 = vpack.c.b16 %v611, %v610
    %v617 = vsel %vm384, %v590, 0
    %v620 = vsel %vm384, %v591, 0
    %v623 = vsel %vm384, %v592, 0
    %625 = vmatprep.subr.bf16.mxu0 0
    %626 = vmatpush1.bf16.msra.mxu0 %v612
    %627 = vmatprep.subr.bf16.mxu0 0
    %628 = vmatpush1.bf16.msra.mxu0 %v613
    %629 = vmatprep.subr.bf16.mxu0 0
    %630 = vmatpush1.bf16.msra.mxu0 0
    %631 = vmatprep.subr.bf16.mxu0 0
    %632 = vmatpush1.bf16.msra.mxu0 0
    %633 = vmatprep.subr.bf16.mxu0 0
    %634 = vmatpush1.bf16.msra.mxu0 0
    %635 = vmatprep.subr.bf16.mxu0 0
    %636 = vmatpush1.bf16.msra.mxu0 0
    %637 = vmatprep.subr.bf16.mxu0 0
    %638 = vmatpush1.bf16.msra.mxu0 0
    %639 = vmatprep.subr.bf16.mxu0 0
    %640 = vmatpush1.bf16.msra.mxu0 0
    %641 = vmatprep.subr.bf16.mxu0 0
    %642 = vmatpush1.bf16.msra.mxu0 0
    %643 = vmatprep.subr.bf16.mxu0 0
    %644 = vmatpush1.bf16.msra.mxu0 0
    %645 = vmatprep.subr.bf16.mxu0 0
    %646 = vmatpush1.bf16.msra.mxu0 0
    %647 = vmatprep.subr.bf16.mxu0 0
    %648 = vmatpush1.bf16.msra.mxu0 0
    %649 = vmatprep.subr.bf16.mxu0 0
    %650 = vmatpush1.bf16.msra.mxu0 0
    %651 = vmatprep.subr.bf16.mxu0 0
    %652 = vmatpush1.bf16.msra.mxu0 0
    %653 = vmatprep.subr.bf16.mxu0 0
    %654 = vmatpush1.bf16.msra.mxu0 0
    %655 = vmatprep.subr.bf16.mxu0 0
    %656 = vmatpush1.bf16.msra.mxu0 0
    %657 = vmatprep.mubr.bf16.mxu0 0
    %658 = vmatmul.mubr.bf16.gmra.mrb[0].mxu0 %v617
    %v659 = vpop.f32.mrb[0].mxu0
    %v660 = vadd.f32 %v602, %v659
    %v661 = vpop.f32.mrb[0].mxu0
    %v662 = vpop.f32.mrb[0].mxu0
    %v663 = vadd.f32 %v602, %v662
    %v664 = vpop.f32.mrb[0].mxu0
    %665 = vmatprep.mubr.bf16.mxu0 0
    %666 = vmatmul.mubr.bf16.gmra.mrb[0].mxu0 %v620
    %v667 = vpop.f32.mrb[0].mxu0
    %v668 = vadd.f32 %v602, %v667
    %v669 = vpop.f32.mrb[0].mxu0
    %v670 = vpop.f32.mrb[0].mxu0
    %v671 = vadd.f32 %v602, %v670
    %v672 = vpop.f32.mrb[0].mxu0
    %673 = vmatprep.mubr.bf16.mxu0 0
    %674 = vmatmul.mubr.bf16.gmra.mrb[0].mxu0 %v623
    %v675 = vpop.f32.mrb[0].mxu0
    %v676 = vadd.f32 %v602, %v675
    %v677 = vpop.f32.mrb[0].mxu0
    %v678 = vpop.f32.mrb[0].mxu0
    %v679 = vpop.f32.mrb[0].mxu0
    %680 = vdwg.mxu0
    %v681 = vmul.f32 %v660, %v660
    %v682 = vmul.f32 %v663, %v663
    %v683 = vmul.f32 %v668, %v668
    %v684 = vmul.f32 %v671, %v671
    %v685 = vmul.f32 %v676, %v676
    %v686 = vsel %vm384, %v681, 0.0
    %687 = vadd.xlane.f32.xlu0 %v686
    %v688 = vpop.xlane.xlu0 %687
    %v689 = vsel %vm384, %v682, 0.0
    %690 = vadd.xlane.f32.xlu0 %v689
    %v691 = vpop.xlane.xlu0 %690
    %v692 = vsel %vm384, %v683, 0.0
    %693 = vadd.xlane.f32.xlu0 %v692
    %v694 = vpop.xlane.xlu0 %693
    %v695 = vsel %vm384, %v684, 0.0
    %696 = vadd.xlane.f32.xlu0 %v695
    %v697 = vpop.xlane.xlu0 %696
    %v698 = vsel %vm384, %v685, 0.0
    %699 = vadd.xlane.f32.xlu0 %v698
    %v700 = vpop.xlane.xlu0 %699
    %v701 = vmax.f32 %v688, 1e-24
    %v702 = vmax.f32 %v691, 1e-24
    %v703 = vmax.f32 %v694, 1e-24
    %v704 = vmax.f32 %v697, 1e-24
    %v705 = vmax.f32 %v700, 1e-24
    %v706 = vrsqrt.pop %v701
    %v707 = vrsqrt.pop %v702
    %v708 = vrsqrt.pop %v703
    %v709 = vrsqrt.pop %v704
    %v710 = vrsqrt.pop %v705
    %v711 = vmul.f32 %v660, %v706
    %v712 = vmul.f32 %v663, %v707
    %v713 = vmul.f32 %v668, %v708
    %v714 = vmul.f32 %v671, %v709
    %v715 = vmul.f32 %v676, %v710
    %v716 = vmul.f32 %v425, %v425
    %v717 = vsel %vm384, %v716, 0.0
    %718 = vadd.xlane.f32.xlu0 %v717
    %v719 = vpop.xlane.xlu0 %718
    %v720 = vmax.f32 %v719, 1e-24
    %v721 = vrsqrt.pop %v720
    %v722 = vmul.f32 %v425, %v721
    %v728 = vcombine.high %v711, %v711
    %v730 = vunpack.c.l.s4 1966171168
    %v731 = vunpack.c.0.s8 %v730
    %v732 = vlaneseq
    %v733 = vshrl.u32 %v732, 7
    %v734 = vsub.s32 %v731, %v733
    %v735 = vrot.slane %v711, %v734
    %v737 = vunpack.c.l.s4 1966171168
    %v738 = vunpack.c.0.s8 %v737
    %v739 = vlaneseq
    %v740 = vshrl.u32 %v739, 7
    %v741 = vsub.s32 %v738, %v740
    %v742 = vrot.slane %v728, %v741
    %v743 = vcombine.high %v735, %v735
    %v744 = vcombine.high %v742, %v742
    %v746 = vunpack.c.l.s4 1966171168
    %v747 = vunpack.c.0.s8 %v746
    %v748 = vlaneseq
    %v749 = vshrl.u32 %v748, 7
    %v750 = vsub.s32 %v747, %v749
    %v751 = vrot.slane %v735, %v750
    %v753 = vunpack.c.l.s4 1966171168
    %v754 = vunpack.c.0.s8 %v753
    %v755 = vlaneseq
    %v756 = vshrl.u32 %v755, 7
    %v757 = vsub.s32 %v754, %v756
    %v758 = vrot.slane %v742, %v757
    %v760 = vunpack.c.l.s4 1966171168
    %v761 = vunpack.c.0.s8 %v760
    %v762 = vlaneseq
    %v763 = vshrl.u32 %v762, 7
    %v764 = vsub.s32 %v761, %v763
    %v765 = vrot.slane %v743, %v764
    %v767 = vunpack.c.l.s4 1966171168
    %v768 = vunpack.c.0.s8 %v767
    %v769 = vlaneseq
    %v770 = vshrl.u32 %v769, 7
    %v771 = vsub.s32 %v768, %v770
    %v772 = vrot.slane %v744, %v771
    %v773 = vcombine.high %v751, %v751
    %v774 = vcombine.high %v758, %v758
    %v775 = vcombine.high %v765, %v765
    %v776 = vcombine.high %v772, %v772
    %v777 = vcombine.high %v712, %v712
    %v779 = vunpack.c.l.s4 1966171168
    %v780 = vunpack.c.0.s8 %v779
    %v781 = vlaneseq
    %v782 = vshrl.u32 %v781, 7
    %v783 = vsub.s32 %v780, %v782
    %v784 = vrot.slane %v712, %v783
    %v786 = vunpack.c.l.s4 1966171168
    %v787 = vunpack.c.0.s8 %v786
    %v788 = vlaneseq
    %v789 = vshrl.u32 %v788, 7
    %v790 = vsub.s32 %v787, %v789
    %v791 = vrot.slane %v777, %v790
    %v792 = vcombine.high %v784, %v784
    %v793 = vcombine.high %v791, %v791
    %v795 = vunpack.c.l.s4 1966171168
    %v796 = vunpack.c.0.s8 %v795
    %v797 = vlaneseq
    %v798 = vshrl.u32 %v797, 7
    %v799 = vsub.s32 %v796, %v798
    %v800 = vrot.slane %v784, %v799
    %v802 = vunpack.c.l.s4 1966171168
    %v803 = vunpack.c.0.s8 %v802
    %v804 = vlaneseq
    %v805 = vshrl.u32 %v804, 7
    %v806 = vsub.s32 %v803, %v805
    %v807 = vrot.slane %v791, %v806
    %v809 = vunpack.c.l.s4 1966171168
    %v810 = vunpack.c.0.s8 %v809
    %v811 = vlaneseq
    %v812 = vshrl.u32 %v811, 7
    %v813 = vsub.s32 %v810, %v812
    %v814 = vrot.slane %v792, %v813
    %v816 = vunpack.c.l.s4 1966171168
    %v817 = vunpack.c.0.s8 %v816
    %v818 = vlaneseq
    %v819 = vshrl.u32 %v818, 7
    %v820 = vsub.s32 %v817, %v819
    %v821 = vrot.slane %v793, %v820
    %v822 = vcombine.high %v800, %v800
    %v823 = vcombine.high %v807, %v807
    %v824 = vcombine.high %v814, %v814
    %v825 = vcombine.high %v821, %v821
    %v826 = vcombine.high %v713, %v713
    %v828 = vunpack.c.l.s4 1966171168
    %v829 = vunpack.c.0.s8 %v828
    %v830 = vlaneseq
    %v831 = vshrl.u32 %v830, 7
    %v832 = vsub.s32 %v829, %v831
    %v833 = vrot.slane %v713, %v832
    %v835 = vunpack.c.l.s4 1966171168
    %v836 = vunpack.c.0.s8 %v835
    %v837 = vlaneseq
    %v838 = vshrl.u32 %v837, 7
    %v839 = vsub.s32 %v836, %v838
    %v840 = vrot.slane %v826, %v839
    %v841 = vcombine.high %v833, %v833
    %v842 = vcombine.high %v840, %v840
    %v844 = vunpack.c.l.s4 1966171168
    %v845 = vunpack.c.0.s8 %v844
    %v846 = vlaneseq
    %v847 = vshrl.u32 %v846, 7
    %v848 = vsub.s32 %v845, %v847
    %v849 = vrot.slane %v833, %v848
    %v851 = vunpack.c.l.s4 1966171168
    %v852 = vunpack.c.0.s8 %v851
    %v853 = vlaneseq
    %v854 = vshrl.u32 %v853, 7
    %v855 = vsub.s32 %v852, %v854
    %v856 = vrot.slane %v840, %v855
    %v858 = vunpack.c.l.s4 1966171168
    %v859 = vunpack.c.0.s8 %v858
    %v860 = vlaneseq
    %v861 = vshrl.u32 %v860, 7
    %v862 = vsub.s32 %v859, %v861
    %v863 = vrot.slane %v841, %v862
    %v865 = vunpack.c.l.s4 1966171168
    %v866 = vunpack.c.0.s8 %v865
    %v867 = vlaneseq
    %v868 = vshrl.u32 %v867, 7
    %v869 = vsub.s32 %v866, %v868
    %v870 = vrot.slane %v842, %v869
    %v871 = vcombine.high %v849, %v849
    %v872 = vcombine.high %v856, %v856
    %v873 = vcombine.high %v863, %v863
    %v874 = vcombine.high %v870, %v870
    %v875 = vcombine.high %v714, %v714
    %v877 = vunpack.c.l.s4 1966171168
    %v878 = vunpack.c.0.s8 %v877
    %v879 = vlaneseq
    %v880 = vshrl.u32 %v879, 7
    %v881 = vsub.s32 %v878, %v880
    %v882 = vrot.slane %v714, %v881
    %v884 = vunpack.c.l.s4 1966171168
    %v885 = vunpack.c.0.s8 %v884
    %v886 = vlaneseq
    %v887 = vshrl.u32 %v886, 7
    %v888 = vsub.s32 %v885, %v887
    %v889 = vrot.slane %v875, %v888
    %v890 = vcombine.high %v882, %v882
    %v891 = vcombine.high %v889, %v889
    %v893 = vunpack.c.l.s4 1966171168
    %v894 = vunpack.c.0.s8 %v893
    %v895 = vlaneseq
    %v896 = vshrl.u32 %v895, 7
    %v897 = vsub.s32 %v894, %v896
    %v898 = vrot.slane %v882, %v897
    %v900 = vunpack.c.l.s4 1966171168
    %v901 = vunpack.c.0.s8 %v900
    %v902 = vlaneseq
    %v903 = vshrl.u32 %v902, 7
    %v904 = vsub.s32 %v901, %v903
    %v905 = vrot.slane %v889, %v904
    %v907 = vunpack.c.l.s4 1966171168
    %v908 = vunpack.c.0.s8 %v907
    %v909 = vlaneseq
    %v910 = vshrl.u32 %v909, 7
    %v911 = vsub.s32 %v908, %v910
    %v912 = vrot.slane %v890, %v911
    %v914 = vunpack.c.l.s4 1966171168
    %v915 = vunpack.c.0.s8 %v914
    %v916 = vlaneseq
    %v917 = vshrl.u32 %v916, 7
    %v918 = vsub.s32 %v915, %v917
    %v919 = vrot.slane %v891, %v918
    %v920 = vcombine.high %v898, %v898
    %v921 = vcombine.high %v905, %v905
    %v922 = vcombine.high %v912, %v912
    %v923 = vcombine.high %v919, %v919
    %v924 = vcombine.high %v715, %v715
    %v926 = vunpack.c.l.s4 1966171168
    %v927 = vunpack.c.0.s8 %v926
    %v928 = vlaneseq
    %v929 = vshrl.u32 %v928, 7
    %v930 = vsub.s32 %v927, %v929
    %v931 = vrot.slane %v715, %v930
    %v933 = vunpack.c.l.s4 1966171168
    %v934 = vunpack.c.0.s8 %v933
    %v935 = vlaneseq
    %v936 = vshrl.u32 %v935, 7
    %v937 = vsub.s32 %v934, %v936
    %v938 = vrot.slane %v924, %v937
    %v939 = vcombine.high %v931, %v931
    %v940 = vcombine.high %v938, %v938
    %v942 = vunpack.c.l.s4 1966171168
    %v943 = vunpack.c.0.s8 %v942
    %v944 = vlaneseq
    %v945 = vshrl.u32 %v944, 7
    %v946 = vsub.s32 %v943, %v945
    %v947 = vrot.slane %v931, %v946
    %v949 = vunpack.c.l.s4 1966171168
    %v950 = vunpack.c.0.s8 %v949
    %v951 = vlaneseq
    %v952 = vshrl.u32 %v951, 7
    %v953 = vsub.s32 %v950, %v952
    %v954 = vrot.slane %v938, %v953
    %v956 = vunpack.c.l.s4 1966171168
    %v957 = vunpack.c.0.s8 %v956
    %v958 = vlaneseq
    %v959 = vshrl.u32 %v958, 7
    %v960 = vsub.s32 %v957, %v959
    %v961 = vrot.slane %v939, %v960
    %v963 = vunpack.c.l.s4 1966171168
    %v964 = vunpack.c.0.s8 %v963
    %v965 = vlaneseq
    %v966 = vshrl.u32 %v965, 7
    %v967 = vsub.s32 %v964, %v966
    %v968 = vrot.slane %v940, %v967
    %v969 = vcombine.high %v947, %v947
    %v970 = vcombine.high %v954, %v954
    %v971 = vcombine.high %v961, %v961
    %v972 = vcombine.high %v968, %v968
    %v1014 = vcombine.high %v722, %v722
    %v1016 = vunpack.c.l.s4 1966171168
    %v1017 = vunpack.c.0.s8 %v1016
    %v1018 = vlaneseq
    %v1019 = vshrl.u32 %v1018, 7
    %v1020 = vsub.s32 %v1017, %v1019
    %v1021 = vrot.slane %v722, %v1020
    %v1023 = vunpack.c.l.s4 1966171168
    %v1024 = vunpack.c.0.s8 %v1023
    %v1025 = vlaneseq
    %v1026 = vshrl.u32 %v1025, 7
    %v1027 = vsub.s32 %v1024, %v1026
    %v1028 = vrot.slane %v1014, %v1027
    %v1029 = vcombine.high %v1021, %v1021
    %v1030 = vcombine.high %v1028, %v1028
    %v1032 = vunpack.c.l.s4 1966171168
    %v1033 = vunpack.c.0.s8 %v1032
    %v1034 = vlaneseq
    %v1035 = vshrl.u32 %v1034, 7
    %v1036 = vsub.s32 %v1033, %v1035
    %v1037 = vrot.slane %v1021, %v1036
    %v1039 = vunpack.c.l.s4 1966171168
    %v1040 = vunpack.c.0.s8 %v1039
    %v1041 = vlaneseq
    %v1042 = vshrl.u32 %v1041, 7
    %v1043 = vsub.s32 %v1040, %v1042
    %v1044 = vrot.slane %v1028, %v1043
    %v1046 = vunpack.c.l.s4 1966171168
    %v1047 = vunpack.c.0.s8 %v1046
    %v1048 = vlaneseq
    %v1049 = vshrl.u32 %v1048, 7
    %v1050 = vsub.s32 %v1047, %v1049
    %v1051 = vrot.slane %v1029, %v1050
    %v1053 = vunpack.c.l.s4 1966171168
    %v1054 = vunpack.c.0.s8 %v1053
    %v1055 = vlaneseq
    %v1056 = vshrl.u32 %v1055, 7
    %v1057 = vsub.s32 %v1054, %v1056
    %v1058 = vrot.slane %v1030, %v1057
    %v1059 = vcombine.high %v1037, %v1037
    %v1060 = vcombine.high %v1044, %v1044
    %v1061 = vcombine.high %v1051, %v1051
    %v1062 = vcombine.high %v1058, %v1058
    %v1063 = vlaneseq
    %v1064 = vshrl.u32 %v1063, 7
    %v1065 = vsub.s32 0, %v1064
    %v1066 = vrot.slane %v1037, %v1065
    %v1067 = vlaneseq
    %v1068 = vshrl.u32 %v1067, 7
    %v1069 = vsub.s32 0, %v1068
    %v1070 = vrot.slane %v1051, %v1069
    %v1071 = vlaneseq
    %v1072 = vshrl.u32 %v1071, 7
    %v1073 = vsub.s32 0, %v1072
    %v1074 = vrot.slane %v1059, %v1073
    %v1075 = vlaneseq
    %v1076 = vshrl.u32 %v1075, 7
    %v1077 = vsub.s32 0, %v1076
    %v1078 = vrot.slane %v1061, %v1077
    %v1079 = vlaneseq
    %v1080 = vshrl.u32 %v1079, 7
    %v1081 = vsub.s32 0, %v1080
    %v1082 = vrot.slane %v1044, %v1081
    %v1083 = vlaneseq
    %v1084 = vshrl.u32 %v1083, 7
    %v1085 = vsub.s32 0, %v1084
    %v1086 = vrot.slane %v1058, %v1085
    %v1087 = vlaneseq
    %v1088 = vshrl.u32 %v1087, 7
    %v1089 = vsub.s32 0, %v1088
    %v1090 = vrot.slane %v1060, %v1089
    %v1091 = vlaneseq
    %v1092 = vshrl.u32 %v1091, 7
    %v1093 = vsub.s32 0, %v1092
    %v1094 = vrot.slane %v1062, %v1093
    %v1095 = vcombine.high %v1066, %v1066
    %v1097 = vunpack.c.l.s4 1966171168
    %v1098 = vunpack.c.0.s8 %v1097
    %v1099 = vlaneseq
    %v1100 = vshrl.u32 %v1099, 7
    %v1101 = vsub.s32 %v1098, %v1100
    %v1102 = vrot.slane %v1066, %v1101
    %v1104 = vunpack.c.l.s4 1966171168
    %v1105 = vunpack.c.0.s8 %v1104
    %v1106 = vlaneseq
    %v1107 = vshrl.u32 %v1106, 7
    %v1108 = vsub.s32 %v1105, %v1107
    %v1109 = vrot.slane %v1095, %v1108
    %v1110 = vcombine.high %v1102, %v1102
    %v1112 = vunpack.c.l.s4 1966171168
    %v1113 = vunpack.c.0.s8 %v1112
    %v1114 = vlaneseq
    %v1115 = vshrl.u32 %v1114, 7
    %v1116 = vsub.s32 %v1113, %v1115
    %v1117 = vrot.slane %v1102, %v1116
    %v1119 = vunpack.c.l.s4 1966171168
    %v1120 = vunpack.c.0.s8 %v1119
    %v1121 = vlaneseq
    %v1122 = vshrl.u32 %v1121, 7
    %v1123 = vsub.s32 %v1120, %v1122
    %v1124 = vrot.slane %v1109, %v1123
    %v1126 = vunpack.c.l.s4 1966171168
    %v1127 = vunpack.c.0.s8 %v1126
    %v1128 = vlaneseq
    %v1129 = vshrl.u32 %v1128, 7
    %v1130 = vsub.s32 %v1127, %v1129
    %v1131 = vrot.slane %v1110, %v1130
    %v1132 = vcombine.high %v1117, %v1117
    %v1133 = vcombine.high %v1131, %v1131
    %v1134 = vcombine.high %v1070, %v1070
    %v1136 = vunpack.c.l.s4 1966171168
    %v1137 = vunpack.c.0.s8 %v1136
    %v1138 = vlaneseq
    %v1139 = vshrl.u32 %v1138, 7
    %v1140 = vsub.s32 %v1137, %v1139
    %v1141 = vrot.slane %v1070, %v1140
    %v1143 = vunpack.c.l.s4 1966171168
    %v1144 = vunpack.c.0.s8 %v1143
    %v1145 = vlaneseq
    %v1146 = vshrl.u32 %v1145, 7
    %v1147 = vsub.s32 %v1144, %v1146
    %v1148 = vrot.slane %v1134, %v1147
    %v1149 = vcombine.high %v1141, %v1141
    %v1151 = vunpack.c.l.s4 1966171168
    %v1152 = vunpack.c.0.s8 %v1151
    %v1153 = vlaneseq
    %v1154 = vshrl.u32 %v1153, 7
    %v1155 = vsub.s32 %v1152, %v1154
    %v1156 = vrot.slane %v1141, %v1155
    %v1158 = vunpack.c.l.s4 1966171168
    %v1159 = vunpack.c.0.s8 %v1158
    %v1160 = vlaneseq
    %v1161 = vshrl.u32 %v1160, 7
    %v1162 = vsub.s32 %v1159, %v1161
    %v1163 = vrot.slane %v1148, %v1162
    %v1165 = vunpack.c.l.s4 1966171168
    %v1166 = vunpack.c.0.s8 %v1165
    %v1167 = vlaneseq
    %v1168 = vshrl.u32 %v1167, 7
    %v1169 = vsub.s32 %v1166, %v1168
    %v1170 = vrot.slane %v1149, %v1169
    %v1171 = vcombine.high %v1156, %v1156
    %v1172 = vcombine.high %v1170, %v1170
    %v1173 = vcombine.high %v1074, %v1074
    %v1175 = vunpack.c.l.s4 1966171168
    %v1176 = vunpack.c.0.s8 %v1175
    %v1177 = vlaneseq
    %v1178 = vshrl.u32 %v1177, 7
    %v1179 = vsub.s32 %v1176, %v1178
    %v1180 = vrot.slane %v1074, %v1179
    %v1182 = vunpack.c.l.s4 1966171168
    %v1183 = vunpack.c.0.s8 %v1182
    %v1184 = vlaneseq
    %v1185 = vshrl.u32 %v1184, 7
    %v1186 = vsub.s32 %v1183, %v1185
    %v1187 = vrot.slane %v1173, %v1186
    %v1188 = vcombine.high %v1180, %v1180
    %v1190 = vunpack.c.l.s4 1966171168
    %v1191 = vunpack.c.0.s8 %v1190
    %v1192 = vlaneseq
    %v1193 = vshrl.u32 %v1192, 7
    %v1194 = vsub.s32 %v1191, %v1193
    %v1195 = vrot.slane %v1180, %v1194
    %v1197 = vunpack.c.l.s4 1966171168
    %v1198 = vunpack.c.0.s8 %v1197
    %v1199 = vlaneseq
    %v1200 = vshrl.u32 %v1199, 7
    %v1201 = vsub.s32 %v1198, %v1200
    %v1202 = vrot.slane %v1187, %v1201
    %v1204 = vunpack.c.l.s4 1966171168
    %v1205 = vunpack.c.0.s8 %v1204
    %v1206 = vlaneseq
    %v1207 = vshrl.u32 %v1206, 7
    %v1208 = vsub.s32 %v1205, %v1207
    %v1209 = vrot.slane %v1188, %v1208
    %v1210 = vcombine.high %v1195, %v1195
    %v1211 = vcombine.high %v1209, %v1209
    %v1212 = vcombine.high %v1078, %v1078
    %v1214 = vunpack.c.l.s4 1966171168
    %v1215 = vunpack.c.0.s8 %v1214
    %v1216 = vlaneseq
    %v1217 = vshrl.u32 %v1216, 7
    %v1218 = vsub.s32 %v1215, %v1217
    %v1219 = vrot.slane %v1078, %v1218
    %v1221 = vunpack.c.l.s4 1966171168
    %v1222 = vunpack.c.0.s8 %v1221
    %v1223 = vlaneseq
    %v1224 = vshrl.u32 %v1223, 7
    %v1225 = vsub.s32 %v1222, %v1224
    %v1226 = vrot.slane %v1212, %v1225
    %v1227 = vcombine.high %v1219, %v1219
    %v1229 = vunpack.c.l.s4 1966171168
    %v1230 = vunpack.c.0.s8 %v1229
    %v1231 = vlaneseq
    %v1232 = vshrl.u32 %v1231, 7
    %v1233 = vsub.s32 %v1230, %v1232
    %v1234 = vrot.slane %v1219, %v1233
    %v1236 = vunpack.c.l.s4 1966171168
    %v1237 = vunpack.c.0.s8 %v1236
    %v1238 = vlaneseq
    %v1239 = vshrl.u32 %v1238, 7
    %v1240 = vsub.s32 %v1237, %v1239
    %v1241 = vrot.slane %v1226, %v1240
    %v1243 = vunpack.c.l.s4 1966171168
    %v1244 = vunpack.c.0.s8 %v1243
    %v1245 = vlaneseq
    %v1246 = vshrl.u32 %v1245, 7
    %v1247 = vsub.s32 %v1244, %v1246
    %v1248 = vrot.slane %v1227, %v1247
    %v1249 = vcombine.high %v1234, %v1234
    %v1250 = vcombine.high %v1248, %v1248
    %v1251 = vcombine.high %v1082, %v1082
    %v1253 = vunpack.c.l.s4 1966171168
    %v1254 = vunpack.c.0.s8 %v1253
    %v1255 = vlaneseq
    %v1256 = vshrl.u32 %v1255, 7
    %v1257 = vsub.s32 %v1254, %v1256
    %v1258 = vrot.slane %v1082, %v1257
    %v1260 = vunpack.c.l.s4 1966171168
    %v1261 = vunpack.c.0.s8 %v1260
    %v1262 = vlaneseq
    %v1263 = vshrl.u32 %v1262, 7
    %v1264 = vsub.s32 %v1261, %v1263
    %v1265 = vrot.slane %v1251, %v1264
    %v1266 = vcombine.high %v1258, %v1258
    %v1268 = vunpack.c.l.s4 1966171168
    %v1269 = vunpack.c.0.s8 %v1268
    %v1270 = vlaneseq
    %v1271 = vshrl.u32 %v1270, 7
    %v1272 = vsub.s32 %v1269, %v1271
    %v1273 = vrot.slane %v1258, %v1272
    %v1275 = vunpack.c.l.s4 1966171168
    %v1276 = vunpack.c.0.s8 %v1275
    %v1277 = vlaneseq
    %v1278 = vshrl.u32 %v1277, 7
    %v1279 = vsub.s32 %v1276, %v1278
    %v1280 = vrot.slane %v1265, %v1279
    %v1282 = vunpack.c.l.s4 1966171168
    %v1283 = vunpack.c.0.s8 %v1282
    %v1284 = vlaneseq
    %v1285 = vshrl.u32 %v1284, 7
    %v1286 = vsub.s32 %v1283, %v1285
    %v1287 = vrot.slane %v1266, %v1286
    %v1288 = vcombine.high %v1273, %v1273
    %v1289 = vcombine.high %v1287, %v1287
    %v1290 = vcombine.high %v1086, %v1086
    %v1292 = vunpack.c.l.s4 1966171168
    %v1293 = vunpack.c.0.s8 %v1292
    %v1294 = vlaneseq
    %v1295 = vshrl.u32 %v1294, 7
    %v1296 = vsub.s32 %v1293, %v1295
    %v1297 = vrot.slane %v1086, %v1296
    %v1299 = vunpack.c.l.s4 1966171168
    %v1300 = vunpack.c.0.s8 %v1299
    %v1301 = vlaneseq
    %v1302 = vshrl.u32 %v1301, 7
    %v1303 = vsub.s32 %v1300, %v1302
    %v1304 = vrot.slane %v1290, %v1303
    %v1305 = vcombine.high %v1297, %v1297
    %v1307 = vunpack.c.l.s4 1966171168
    %v1308 = vunpack.c.0.s8 %v1307
    %v1309 = vlaneseq
    %v1310 = vshrl.u32 %v1309, 7
    %v1311 = vsub.s32 %v1308, %v1310
    %v1312 = vrot.slane %v1297, %v1311
    %v1314 = vunpack.c.l.s4 1966171168
    %v1315 = vunpack.c.0.s8 %v1314
    %v1316 = vlaneseq
    %v1317 = vshrl.u32 %v1316, 7
    %v1318 = vsub.s32 %v1315, %v1317
    %v1319 = vrot.slane %v1304, %v1318
    %v1321 = vunpack.c.l.s4 1966171168
    %v1322 = vunpack.c.0.s8 %v1321
    %v1323 = vlaneseq
    %v1324 = vshrl.u32 %v1323, 7
    %v1325 = vsub.s32 %v1322, %v1324
    %v1326 = vrot.slane %v1305, %v1325
    %v1327 = vcombine.high %v1312, %v1312
    %v1328 = vcombine.high %v1326, %v1326
    %v1329 = vcombine.high %v1090, %v1090
    %v1331 = vunpack.c.l.s4 1966171168
    %v1332 = vunpack.c.0.s8 %v1331
    %v1333 = vlaneseq
    %v1334 = vshrl.u32 %v1333, 7
    %v1335 = vsub.s32 %v1332, %v1334
    %v1336 = vrot.slane %v1090, %v1335
    %v1338 = vunpack.c.l.s4 1966171168
    %v1339 = vunpack.c.0.s8 %v1338
    %v1340 = vlaneseq
    %v1341 = vshrl.u32 %v1340, 7
    %v1342 = vsub.s32 %v1339, %v1341
    %v1343 = vrot.slane %v1329, %v1342
    %v1344 = vcombine.high %v1336, %v1336
    %v1346 = vunpack.c.l.s4 1966171168
    %v1347 = vunpack.c.0.s8 %v1346
    %v1348 = vlaneseq
    %v1349 = vshrl.u32 %v1348, 7
    %v1350 = vsub.s32 %v1347, %v1349
    %v1351 = vrot.slane %v1336, %v1350
    %v1353 = vunpack.c.l.s4 1966171168
    %v1354 = vunpack.c.0.s8 %v1353
    %v1355 = vlaneseq
    %v1356 = vshrl.u32 %v1355, 7
    %v1357 = vsub.s32 %v1354, %v1356
    %v1358 = vrot.slane %v1343, %v1357
    %v1360 = vunpack.c.l.s4 1966171168
    %v1361 = vunpack.c.0.s8 %v1360
    %v1362 = vlaneseq
    %v1363 = vshrl.u32 %v1362, 7
    %v1364 = vsub.s32 %v1361, %v1363
    %v1365 = vrot.slane %v1344, %v1364
    %v1366 = vcombine.high %v1351, %v1351
    %v1367 = vcombine.high %v1365, %v1365
    %v1368 = vcombine.high %v1094, %v1094
    %v1370 = vunpack.c.l.s4 1966171168
    %v1371 = vunpack.c.0.s8 %v1370
    %v1372 = vlaneseq
    %v1373 = vshrl.u32 %v1372, 7
    %v1374 = vsub.s32 %v1371, %v1373
    %v1375 = vrot.slane %v1094, %v1374
    %v1377 = vunpack.c.l.s4 1966171168
    %v1378 = vunpack.c.0.s8 %v1377
    %v1379 = vlaneseq
    %v1380 = vshrl.u32 %v1379, 7
    %v1381 = vsub.s32 %v1378, %v1380
    %v1382 = vrot.slane %v1368, %v1381
    %v1383 = vcombine.high %v1375, %v1375
    %v1385 = vunpack.c.l.s4 1966171168
    %v1386 = vunpack.c.0.s8 %v1385
    %v1387 = vlaneseq
    %v1388 = vshrl.u32 %v1387, 7
    %v1389 = vsub.s32 %v1386, %v1388
    %v1390 = vrot.slane %v1375, %v1389
    %v1392 = vunpack.c.l.s4 1966171168
    %v1393 = vunpack.c.0.s8 %v1392
    %v1394 = vlaneseq
    %v1395 = vshrl.u32 %v1394, 7
    %v1396 = vsub.s32 %v1393, %v1395
    %v1397 = vrot.slane %v1382, %v1396
    %v1399 = vunpack.c.l.s4 1966171168
    %v1400 = vunpack.c.0.s8 %v1399
    %v1401 = vlaneseq
    %v1402 = vshrl.u32 %v1401, 7
    %v1403 = vsub.s32 %v1400, %v1402
    %v1404 = vrot.slane %v1383, %v1403
    %v1405 = vcombine.high %v1390, %v1390
    %v1406 = vcombine.high %v1404, %v1404
    %v1447 = vmul.f32 %v751, %v1117
    %v1448 = vmul.f32 %v765, %v1131
    %v1449 = vmul.f32 %v773, %v1132
    %v1450 = vmul.f32 %v775, %v1133
    %v1451 = vmul.f32 %v758, %v1124
    %v1452 = vmul.f32 %v772, %v1156
    %v1453 = vmul.f32 %v774, %v1170
    %v1454 = vmul.f32 %v776, %v1171
    %v1455 = vmul.f32 %v800, %v1172
    %v1456 = vmul.f32 %v814, %v1163
    %v1457 = vmul.f32 %v822, %v1195
    %v1458 = vmul.f32 %v824, %v1209
    %v1459 = vmul.f32 %v807, %v1210
    %v1460 = vmul.f32 %v821, %v1211
    %v1461 = vmul.f32 %v823, %v1202
    %v1462 = vmul.f32 %v825, %v1234
    %v1463 = vmul.f32 %v849, %v1248
    %v1464 = vmul.f32 %v863, %v1249
    %v1465 = vmul.f32 %v871, %v1250
    %v1466 = vmul.f32 %v873, %v1241
    %v1467 = vmul.f32 %v856, %v1273
    %v1468 = vmul.f32 %v870, %v1287
    %v1469 = vmul.f32 %v872, %v1288
    %v1470 = vmul.f32 %v874, %v1289
    %v1471 = vmul.f32 %v898, %v1280
    %v1472 = vmul.f32 %v912, %v1312
    %v1473 = vmul.f32 %v920, %v1326
    %v1474 = vmul.f32 %v922, %v1327
    %v1475 = vmul.f32 %v905, %v1328
    %v1476 = vmul.f32 %v919, %v1319
    %v1477 = vmul.f32 %v921, %v1351
    %v1478 = vmul.f32 %v923, %v1365
    %v1479 = vmul.f32 %v947, %v1366
    %v1480 = vmul.f32 %v961, %v1367
    %v1481 = vmul.f32 %v969, %v1358
    %v1482 = vmul.f32 %v971, %v1390
    %v1483 = vmul.f32 %v954, %v1404
    %v1484 = vmul.f32 %v968, %v1405
    %v1485 = vmul.f32 %v970, %v1406
    %v1486 = vmul.f32 %v972, %v1397
    %v1527 = vcombine.low %v1447, %v1448
    %v1528 = vcombine.low %v1449, %v1450
    %v1530 = vunpack.c.l.s4 1966171168
    %v1531 = vunpack.c.0.s8 %v1530
    %v1532 = vlaneseq
    %v1533 = vshrl.u32 %v1532, 7
    %v1534 = vsub.s32 %v1531, %v1533
    %v1535 = vrot.slane %v1527, %v1534
    %v1537 = vunpack.c.l.s4 1966171168
    %v1538 = vunpack.c.0.s8 %v1537
    %v1539 = vlaneseq
    %v1540 = vshrl.u32 %v1539, 7
    %v1541 = vsub.s32 %v1538, %v1540
    %v1542 = vrot.slane %v1528, %v1541
    %v1544 = vunpack.c.l.s4 1966171168
    %v1545 = vunpack.c.0.s8 %v1544
    %v1546 = vlaneseq
    %v1547 = vshrl.u32 %v1546, 7
    %v1548 = vsub.s32 %v1545, %v1547
    %v1549 = vrot.slane %v1451, %v1548
    %v1550 = vcombine.low %v1535, %v1542
    %v1552 = vunpack.c.l.s4 1966171168
    %v1553 = vunpack.c.0.s8 %v1552
    %v1554 = vlaneseq
    %v1555 = vshrl.u32 %v1554, 7
    %v1556 = vsub.s32 %v1553, %v1555
    %v1557 = vrot.slane %v1550, %v1556
    %v1559 = vunpack.c.l.s4 1966171168
    %v1560 = vunpack.c.0.s8 %v1559
    %v1561 = vlaneseq
    %v1562 = vshrl.u32 %v1561, 7
    %v1563 = vsub.s32 %v1560, %v1562
    %v1564 = vrot.slane %v1549, %v1563
    %v1565 = vcombine.low %v1557, %v1564
    %v1566 = vcombine.low %v1452, %v1453
    %v1567 = vcombine.low %v1454, %v1455
    %v1569 = vunpack.c.l.s4 1966171168
    %v1570 = vunpack.c.0.s8 %v1569
    %v1571 = vlaneseq
    %v1572 = vshrl.u32 %v1571, 7
    %v1573 = vsub.s32 %v1570, %v1572
    %v1574 = vrot.slane %v1566, %v1573
    %v1576 = vunpack.c.l.s4 1966171168
    %v1577 = vunpack.c.0.s8 %v1576
    %v1578 = vlaneseq
    %v1579 = vshrl.u32 %v1578, 7
    %v1580 = vsub.s32 %v1577, %v1579
    %v1581 = vrot.slane %v1567, %v1580
    %v1583 = vunpack.c.l.s4 1966171168
    %v1584 = vunpack.c.0.s8 %v1583
    %v1585 = vlaneseq
    %v1586 = vshrl.u32 %v1585, 7
    %v1587 = vsub.s32 %v1584, %v1586
    %v1588 = vrot.slane %v1456, %v1587
    %v1589 = vcombine.low %v1574, %v1581
    %v1591 = vunpack.c.l.s4 1966171168
    %v1592 = vunpack.c.0.s8 %v1591
    %v1593 = vlaneseq
    %v1594 = vshrl.u32 %v1593, 7
    %v1595 = vsub.s32 %v1592, %v1594
    %v1596 = vrot.slane %v1589, %v1595
    %v1598 = vunpack.c.l.s4 1966171168
    %v1599 = vunpack.c.0.s8 %v1598
    %v1600 = vlaneseq
    %v1601 = vshrl.u32 %v1600, 7
    %v1602 = vsub.s32 %v1599, %v1601
    %v1603 = vrot.slane %v1588, %v1602
    %v1604 = vcombine.low %v1596, %v1603
    %v1605 = vcombine.low %v1457, %v1458
    %v1606 = vcombine.low %v1459, %v1460
    %v1608 = vunpack.c.l.s4 1966171168
    %v1609 = vunpack.c.0.s8 %v1608
    %v1610 = vlaneseq
    %v1611 = vshrl.u32 %v1610, 7
    %v1612 = vsub.s32 %v1609, %v1611
    %v1613 = vrot.slane %v1605, %v1612
    %v1615 = vunpack.c.l.s4 1966171168
    %v1616 = vunpack.c.0.s8 %v1615
    %v1617 = vlaneseq
    %v1618 = vshrl.u32 %v1617, 7
    %v1619 = vsub.s32 %v1616, %v1618
    %v1620 = vrot.slane %v1606, %v1619
    %v1622 = vunpack.c.l.s4 1966171168
    %v1623 = vunpack.c.0.s8 %v1622
    %v1624 = vlaneseq
    %v1625 = vshrl.u32 %v1624, 7
    %v1626 = vsub.s32 %v1623, %v1625
    %v1627 = vrot.slane %v1461, %v1626
    %v1628 = vcombine.low %v1613, %v1620
    %v1630 = vunpack.c.l.s4 1966171168
    %v1631 = vunpack.c.0.s8 %v1630
    %v1632 = vlaneseq
    %v1633 = vshrl.u32 %v1632, 7
    %v1634 = vsub.s32 %v1631, %v1633
    %v1635 = vrot.slane %v1628, %v1634
    %v1637 = vunpack.c.l.s4 1966171168
    %v1638 = vunpack.c.0.s8 %v1637
    %v1639 = vlaneseq
    %v1640 = vshrl.u32 %v1639, 7
    %v1641 = vsub.s32 %v1638, %v1640
    %v1642 = vrot.slane %v1627, %v1641
    %v1643 = vcombine.low %v1635, %v1642
    %v1644 = vcombine.low %v1462, %v1463
    %v1645 = vcombine.low %v1464, %v1465
    %v1647 = vunpack.c.l.s4 1966171168
    %v1648 = vunpack.c.0.s8 %v1647
    %v1649 = vlaneseq
    %v1650 = vshrl.u32 %v1649, 7
    %v1651 = vsub.s32 %v1648, %v1650
    %v1652 = vrot.slane %v1644, %v1651
    %v1654 = vunpack.c.l.s4 1966171168
    %v1655 = vunpack.c.0.s8 %v1654
    %v1656 = vlaneseq
    %v1657 = vshrl.u32 %v1656, 7
    %v1658 = vsub.s32 %v1655, %v1657
    %v1659 = vrot.slane %v1645, %v1658
    %v1661 = vunpack.c.l.s4 1966171168
    %v1662 = vunpack.c.0.s8 %v1661
    %v1663 = vlaneseq
    %v1664 = vshrl.u32 %v1663, 7
    %v1665 = vsub.s32 %v1662, %v1664
    %v1666 = vrot.slane %v1466, %v1665
    %v1667 = vcombine.low %v1652, %v1659
    %v1669 = vunpack.c.l.s4 1966171168
    %v1670 = vunpack.c.0.s8 %v1669
    %v1671 = vlaneseq
    %v1672 = vshrl.u32 %v1671, 7
    %v1673 = vsub.s32 %v1670, %v1672
    %v1674 = vrot.slane %v1667, %v1673
    %v1676 = vunpack.c.l.s4 1966171168
    %v1677 = vunpack.c.0.s8 %v1676
    %v1678 = vlaneseq
    %v1679 = vshrl.u32 %v1678, 7
    %v1680 = vsub.s32 %v1677, %v1679
    %v1681 = vrot.slane %v1666, %v1680
    %v1682 = vcombine.low %v1674, %v1681
    %v1683 = vcombine.low %v1467, %v1468
    %v1684 = vcombine.low %v1469, %v1470
    %v1686 = vunpack.c.l.s4 1966171168
    %v1687 = vunpack.c.0.s8 %v1686
    %v1688 = vlaneseq
    %v1689 = vshrl.u32 %v1688, 7
    %v1690 = vsub.s32 %v1687, %v1689
    %v1691 = vrot.slane %v1683, %v1690
    %v1693 = vunpack.c.l.s4 1966171168
    %v1694 = vunpack.c.0.s8 %v1693
    %v1695 = vlaneseq
    %v1696 = vshrl.u32 %v1695, 7
    %v1697 = vsub.s32 %v1694, %v1696
    %v1698 = vrot.slane %v1684, %v1697
    %v1700 = vunpack.c.l.s4 1966171168
    %v1701 = vunpack.c.0.s8 %v1700
    %v1702 = vlaneseq
    %v1703 = vshrl.u32 %v1702, 7
    %v1704 = vsub.s32 %v1701, %v1703
    %v1705 = vrot.slane %v1471, %v1704
    %v1706 = vcombine.low %v1691, %v1698
    %v1708 = vunpack.c.l.s4 1966171168
    %v1709 = vunpack.c.0.s8 %v1708
    %v1710 = vlaneseq
    %v1711 = vshrl.u32 %v1710, 7
    %v1712 = vsub.s32 %v1709, %v1711
    %v1713 = vrot.slane %v1706, %v1712
    %v1715 = vunpack.c.l.s4 1966171168
    %v1716 = vunpack.c.0.s8 %v1715
    %v1717 = vlaneseq
    %v1718 = vshrl.u32 %v1717, 7
    %v1719 = vsub.s32 %v1716, %v1718
    %v1720 = vrot.slane %v1705, %v1719
    %v1721 = vcombine.low %v1713, %v1720
    %v1722 = vcombine.low %v1472, %v1473
    %v1723 = vcombine.low %v1474, %v1475
    %v1725 = vunpack.c.l.s4 1966171168
    %v1726 = vunpack.c.0.s8 %v1725
    %v1727 = vlaneseq
    %v1728 = vshrl.u32 %v1727, 7
    %v1729 = vsub.s32 %v1726, %v1728
    %v1730 = vrot.slane %v1722, %v1729
    %v1732 = vunpack.c.l.s4 1966171168
    %v1733 = vunpack.c.0.s8 %v1732
    %v1734 = vlaneseq
    %v1735 = vshrl.u32 %v1734, 7
    %v1736 = vsub.s32 %v1733, %v1735
    %v1737 = vrot.slane %v1723, %v1736
    %v1739 = vunpack.c.l.s4 1966171168
    %v1740 = vunpack.c.0.s8 %v1739
    %v1741 = vlaneseq
    %v1742 = vshrl.u32 %v1741, 7
    %v1743 = vsub.s32 %v1740, %v1742
    %v1744 = vrot.slane %v1476, %v1743
    %v1745 = vcombine.low %v1730, %v1737
    %v1747 = vunpack.c.l.s4 1966171168
    %v1748 = vunpack.c.0.s8 %v1747
    %v1749 = vlaneseq
    %v1750 = vshrl.u32 %v1749, 7
    %v1751 = vsub.s32 %v1748, %v1750
    %v1752 = vrot.slane %v1745, %v1751
    %v1754 = vunpack.c.l.s4 1966171168
    %v1755 = vunpack.c.0.s8 %v1754
    %v1756 = vlaneseq
    %v1757 = vshrl.u32 %v1756, 7
    %v1758 = vsub.s32 %v1755, %v1757
    %v1759 = vrot.slane %v1744, %v1758
    %v1760 = vcombine.low %v1752, %v1759
    %v1761 = vcombine.low %v1477, %v1478
    %v1762 = vcombine.low %v1479, %v1480
    %v1764 = vunpack.c.l.s4 1966171168
    %v1765 = vunpack.c.0.s8 %v1764
    %v1766 = vlaneseq
    %v1767 = vshrl.u32 %v1766, 7
    %v1768 = vsub.s32 %v1765, %v1767
    %v1769 = vrot.slane %v1761, %v1768
    %v1771 = vunpack.c.l.s4 1966171168
    %v1772 = vunpack.c.0.s8 %v1771
    %v1773 = vlaneseq
    %v1774 = vshrl.u32 %v1773, 7
    %v1775 = vsub.s32 %v1772, %v1774
    %v1776 = vrot.slane %v1762, %v1775
    %v1778 = vunpack.c.l.s4 1966171168
    %v1779 = vunpack.c.0.s8 %v1778
    %v1780 = vlaneseq
    %v1781 = vshrl.u32 %v1780, 7
    %v1782 = vsub.s32 %v1779, %v1781
    %v1783 = vrot.slane %v1481, %v1782
    %v1784 = vcombine.low %v1769, %v1776
    %v1786 = vunpack.c.l.s4 1966171168
    %v1787 = vunpack.c.0.s8 %v1786
    %v1788 = vlaneseq
    %v1789 = vshrl.u32 %v1788, 7
    %v1790 = vsub.s32 %v1787, %v1789
    %v1791 = vrot.slane %v1784, %v1790
    %v1793 = vunpack.c.l.s4 1966171168
    %v1794 = vunpack.c.0.s8 %v1793
    %v1795 = vlaneseq
    %v1796 = vshrl.u32 %v1795, 7
    %v1797 = vsub.s32 %v1794, %v1796
    %v1798 = vrot.slane %v1783, %v1797
    %v1799 = vcombine.low %v1791, %v1798
    %v1800 = vcombine.low %v1482, %v1483
    %v1801 = vcombine.low %v1484, %v1485
    %v1803 = vunpack.c.l.s4 1966171168
    %v1804 = vunpack.c.0.s8 %v1803
    %v1805 = vlaneseq
    %v1806 = vshrl.u32 %v1805, 7
    %v1807 = vsub.s32 %v1804, %v1806
    %v1808 = vrot.slane %v1800, %v1807
    %v1810 = vunpack.c.l.s4 1966171168
    %v1811 = vunpack.c.0.s8 %v1810
    %v1812 = vlaneseq
    %v1813 = vshrl.u32 %v1812, 7
    %v1814 = vsub.s32 %v1811, %v1813
    %v1815 = vrot.slane %v1801, %v1814
    %v1817 = vunpack.c.l.s4 1966171168
    %v1818 = vunpack.c.0.s8 %v1817
    %v1819 = vlaneseq
    %v1820 = vshrl.u32 %v1819, 7
    %v1821 = vsub.s32 %v1818, %v1820
    %v1822 = vrot.slane %v1486, %v1821
    %v1823 = vcombine.low %v1808, %v1815
    %v1825 = vunpack.c.l.s4 1966171168
    %v1826 = vunpack.c.0.s8 %v1825
    %v1827 = vlaneseq
    %v1828 = vshrl.u32 %v1827, 7
    %v1829 = vsub.s32 %v1826, %v1828
    %v1830 = vrot.slane %v1823, %v1829
    %v1832 = vunpack.c.l.s4 1966171168
    %v1833 = vunpack.c.0.s8 %v1832
    %v1834 = vlaneseq
    %v1835 = vshrl.u32 %v1834, 7
    %v1836 = vsub.s32 %v1833, %v1835
    %v1837 = vrot.slane %v1822, %v1836
    %v1838 = vcombine.low %v1830, %v1837
    %vm1847 = vcmask 258048
    %v1848 = vsel %vm1847, %v1565, 0.0
    %1849 = vadd.xlane.f32.xlu0 %v1848
    %v1850 = vpop.xlane.xlu0 %1849
    %v1851 = vsel %vm1847, %v1604, 0.0
    %1852 = vadd.xlane.f32.xlu0 %v1851
    %v1853 = vpop.xlane.xlu0 %1852
    %v1854 = vsel %vm1847, %v1643, 0.0
    %1855 = vadd.xlane.f32.xlu0 %v1854
    %v1856 = vpop.xlane.xlu0 %1855
    %v1857 = vsel %vm1847, %v1682, 0.0
    %1858 = vadd.xlane.f32.xlu0 %v1857
    %v1859 = vpop.xlane.xlu0 %1858
    %v1860 = vsel %vm1847, %v1721, 0.0
    %1861 = vadd.xlane.f32.xlu0 %v1860
    %v1862 = vpop.xlane.xlu0 %1861
    %v1863 = vsel %vm1847, %v1760, 0.0
    %1864 = vadd.xlane.f32.xlu0 %v1863
    %v1865 = vpop.xlane.xlu0 %1864
    %v1866 = vsel %vm1847, %v1799, 0.0
    %1867 = vadd.xlane.f32.xlu0 %v1866
    %v1868 = vpop.xlane.xlu0 %1867
    %v1869 = vsel %vm1847, %v1838, 0.0
    %1870 = vadd.xlane.f32.xlu0 %v1869
    %v1871 = vpop.xlane.xlu0 %1870
    %v1872 = vld [vmem:[%s2] sm:$0xff]
    %v1881 = vlaneseq
    %v1882 = vand.u32 %v1881, 127
    %v1883 = vlaneseq
    %v1884 = vshrl.u32 %v1883, 7
    %v1885 = vsub.s32 %v1882, %v1884
    %v1886 = vrot.slane %v1850, %v1885
    %v1887 = vlaneseq
    %v1888 = vshrl.u32 %v1887, 7
    %v1889 = vsub.s32 %v1882, %v1888
    %v1890 = vrot.slane %v1853, %v1889
    %v1891 = vlaneseq
    %v1892 = vshrl.u32 %v1891, 7
    %v1893 = vsub.s32 %v1882, %v1892
    %v1894 = vrot.slane %v1856, %v1893
    %v1895 = vlaneseq
    %v1896 = vshrl.u32 %v1895, 7
    %v1897 = vsub.s32 %v1882, %v1896
    %v1898 = vrot.slane %v1859, %v1897
    %v1899 = vlaneseq
    %v1900 = vshrl.u32 %v1899, 7
    %v1901 = vsub.s32 %v1882, %v1900
    %v1902 = vrot.slane %v1862, %v1901
    %v1903 = vlaneseq
    %v1904 = vshrl.u32 %v1903, 7
    %v1905 = vsub.s32 %v1882, %v1904
    %v1906 = vrot.slane %v1865, %v1905
    %v1907 = vlaneseq
    %v1908 = vshrl.u32 %v1907, 7
    %v1909 = vsub.s32 %v1882, %v1908
    %v1910 = vrot.slane %v1868, %v1909
    %v1911 = vlaneseq
    %v1912 = vshrl.u32 %v1911, 7
    %v1913 = vsub.s32 %v1882, %v1912
    %v1914 = vrot.slane %v1871, %v1913
    %vm1915 = vcmask 1041409
    %v1916 = vsel %vm1915, %v1890, %v1886
    %vm1917 = vcmask 1042434
    %v1918 = vsel %vm1917, %v1894, %v1916
    %vm1919 = vcmask 1043459
    %v1920 = vsel %vm1919, %v1898, %v1918
    %vm1921 = vcmask 1044484
    %v1922 = vsel %vm1921, %v1902, %v1920
    %vm1923 = vcmask 1045509
    %v1924 = vsel %vm1923, %v1906, %v1922
    %vm1925 = vcmask 1046534
    %v1926 = vsel %vm1925, %v1910, %v1924
    %vm1927 = vcmask 1047559
    %v1928 = vsel %vm1927, %v1914, %v1926
    %v1930 = vmul.f32 %v1872, %v1928
    %vm1931 = vcmask 39936
    %v1932 = vsel %vm1931, %v1930, -inf
    %1933 = vmax.xlane.f32.xlu0 %v1932
    %v1934 = vpop.xlane.xlu0 %1933
    %vm1935 = vcmp.eq.f32.partialorder %v1930, %v1934
    %v1936 = vsel %vm1935, %v1882, 5
    %v1937 = vsel %vm1931, %v1936, 2147483647
    %v1938 = vand.u32 %v1937, 65535
    %v1939 = vshra.s32 %v1937, 16
    %v1940 = vcvt.s32.f32 %v1938
    %v1941 = vcvt.s32.f32 %v1939
    %1942 = vmin.xlane.f32.xlu0 %v1941
    %v1943 = vpop.xlane.xlu0 %1942
    %vm1944 = vcmp.eq.f32.partialorder %v1941, %v1943
    %v1945 = vsel %vm1944, %v1940, inf
    %1946 = vmin.xlane.f32.xlu0 %v1945
    %v1947 = vpop.xlane.xlu0 %1946
    %v1948 = vcvt.f32.s32 %v1947
    %v1949 = vcvt.f32.s32 %v1943
    %v1950 = vshll.u32 %v1949, 16
    %v1951 = vadd.s32 %v1950, %v1948
    %vm1952 = vcmask 285952
    %v1953 = vsel %vm1952, %v244, -inf
    %1954 = vmax.xlane.f32.xlu0 %v1953
    %v1955 = vpop.xlane.xlu0 %1954
    %v1956 = vsub.f32 %v244, %v1955
    %v1957 = vmul.f32 %v1956, 1.442695
    %v1958 = vpow.pop %v1957
    %1960 = vrot.lane.b32.xlu0 %v1958, 96
    %v1961 = vpop.permute.xlu0 %1960
    %vm1963 = vcmask 23552
    %v1964 = vsel %vm1963, %v1961, 0.0
    %1965 = vadd.xlane.f32.xlu0 %v1964
    %v1966 = vpop.xlane.xlu0 %1965
    %v1967 = vrcp.pop %v1966
    %v1968 = vmul.f32 %v1958, %v1967
    %v1969 = vmul.f32 %v1968, %v453
    %v1970 = vmul.f32 %v1968, %v478
    %1972 = vrot.lane.b32.xlu0 %v1970, 127
    %v1973 = vpop.permute.xlu0 %1972
    %v1975 = vadd.f32 %v1969, %v1973
    %v1976 = vmul.f32 %v1968, %v1934
    %1978 = vrot.lane.b32.xlu0 %v1976, 126
    %v1979 = vpop.permute.xlu0 %1978
    %v1981 = vadd.f32 %v1975, %v1979
    %vm1982 = vcmp.eq.s32.totalorder %v1882, 0
    %1984 = vset.pattern.permute.xlu0 32
    %1985 = vperm.xlu0 %1984, %v1981
    %v1986 = vpop.permute.xlu0 %1985
    %v1988 = vsel %vm1982, %v1986, 0.0
    %vm1989 = vcmp.eq.s32.totalorder %v1882, 1
    %1991 = vset.pattern.permute.xlu0 32
    %1992 = vperm.xlu0 %1991, %v1968
    %v1993 = vpop.permute.xlu0 %1992
    %v1995 = vsel %vm1989, %v1993, %v1988
    %vm1996 = vcmp.eq.s32.totalorder %v1882, 2
    %1997 = vset.pattern.permute.xlu0 33
    %1998 = vperm.xlu0 %1997, %v1968
    %v1999 = vpop.permute.xlu0 %1998
    %v2001 = vsel %vm1996, %v1999, %v1995
    %vm2002 = vcmp.eq.s32.totalorder %v1882, 3
    %2003 = vset.pattern.permute.xlu0 34
    %2004 = vperm.xlu0 %2003, %v1968
    %v2005 = vpop.permute.xlu0 %2004
    %v2007 = vsel %vm2002, %v2005, %v2001
    %vm2008 = vcmp.eq.s32.totalorder %v1882, 4
    %v2009 = vcvt.s32.f32 %v1951
    %v2010 = vsel %vm2008, %v2009, %v2007
    %vm2011 = vcmp.eq.s32.totalorder %v1882, 5
    %v2012 = vsel %vm2011, %v453, %v2010
    %vm2013 = vcmp.eq.s32.totalorder %v1882, 6
    %v2014 = vsel %vm2013, %v478, %v2012
    %vm2015 = vcmp.eq.s32.totalorder %v1882, 7
    %v2016 = vsel %vm2015, %v1934, %v2014
    %2017 = vst [vmem:[#allocation2] sm:$0xff] %v2016
    // Predicated region
    $region46: #{tpu_custom_call.1} parent=1 // pred_check
      _
    $region47: #{tpu_custom_call.1} parent=1 // pred_check_branch
      %2019 = sbr.rel (0) target = $region49
    $region48: #{tpu_custom_call.1} parent=1 // pred_region
      %s2021 = ssub.s32 128, 128
      %2022 = vsyncadd [#allocation3], %s2021
      %s2024 = sshll.u32 [#allocation2], 4
      %s2025 = int_to_ptr.vmem [resolvable:$true] %s2024
      %2027 = dma.vmem_to_hbm [thread:$0]  %s2025, 128, %s11, [#allocation3]
    $region49: #{tpu_custom_call.1} parent=1 // pred_fallthru
      _
    // Predicated region
    $region50: #{tpu_custom_call.1} parent=1 // pred_check
      _
    $region51: #{tpu_custom_call.1} parent=1 // pred_check_branch
      %2029 = sbr.rel (0) target = $region53
    $region52: #{tpu_custom_call.1} parent=1 // pred_region
      %2030 = dma.done [#allocation3], 128
    $region53: #{tpu_custom_call.1} parent=1 // pred_fallthru
      _
    %2031 = vsyncpa [#allocation3], 1

</llo_original>
